<compile_context>
chip_gen: v5e
topology: v5e:2x2
jax: 0.10.0
libtpu: 0.0.40
codegen_flags: <defaults>
</compile_context>

<pallas_src>
from functools import partial

import jax
import jax.numpy as jnp
from jax.experimental import pallas as pl
from jax.experimental.pallas import tpu as pltpu

EMB_DIM = 128
FILTER_SIZES = list(range(2, 20))   # conv_filters = np.arange(2, 20)
NF = len(FILTER_SIZES)              # 18
NFP = 128                           # lane-padded number of filters per tap group
FSMAX = max(FILTER_SIZES)           # 19
NCOL = FSMAX * NFP                  # 2432 tap-packed output columns


def _round_up(x, m):
    return ((x + m - 1) // m) * m


def cnn_kernel(emb_ref, w_ref, mb_ref, feat_ref):
    # emb_ref : (1, Lp, 128)       bf16  one batch element's padded embeddings
    # w_ref   : (128, FSMAX*128)   bf16  tap-packed conv weights (zero pads)
    # mb_ref  : (TP, 128)          f32   conv bias where (t, f) valid, else -1e30
    # feat_ref: (1, 1, 128)        f32   max-over-time conv features
    TP = mb_ref.shape[0]
    x = emb_ref[0]                                           # (Lp, 128)

    # One lane-dense MXU matmul: every tap x every filter at every position.
    p = jnp.dot(x, w_ref[...],
                preferred_element_type=jnp.float32)          # (Lp, FSMAX*128)

    # Sum the FSMAX shifted tap groups (static unroll; lane slices are
    # 128-aligned, the small sublane shift k goes to the XLU), on top of the
    # finite bias/validity mask.
    scores = mb_ref[...]                                     # (TP, 128)
    for k in range(FSMAX):
        scores = scores + p[k:k + TP, k * NFP:(k + 1) * NFP]

    # Max over time -> lane-dense feature row.
    feat_ref[0] = jnp.max(scores, axis=0, keepdims=True)     # (1, 128)


def prepare_params(params, L):
    """One-time, parameter-only packing (hoisted out of the per-call path)."""
    assert L >= FSMAX, "sequence length must be >= largest conv filter (19)"
    TMAX = L - FILTER_SIZES[0] + 1          # positions for the smallest filter
    TP = _round_up(TMAX, 8)                 # sublane-padded time positions
    Lp = _round_up(TP + FSMAX - 1, 8)       # every shifted read stays in bounds

    # Tap-packed conv weights: column (k*NFP + f) holds conv_w[f][k, :]
    # (zero beyond each filter's length / beyond the 18 real filters).
    w_full = jnp.zeros((FSMAX, EMB_DIM, NFP), jnp.float32)
    for f, fs in enumerate(FILTER_SIZES):
        w_full = w_full.at[:fs, :, f].set(params["conv_w"][f].astype(jnp.float32))
    w_taps = (w_full.transpose(1, 0, 2)
              .reshape(EMB_DIM, NCOL)
              .astype(jnp.bfloat16))                          # (128, 2432)

    # Conv bias folded into a finite validity mask (single in-kernel add).
    fs_pad = jnp.full((NFP,), L + 1, jnp.int32).at[:NF].set(
        jnp.asarray(FILTER_SIZES, jnp.int32))
    cb_pad = jnp.zeros((NFP,), jnp.float32).at[:NF].set(
        params["conv_b"].astype(jnp.float32))
    t_idx = jnp.arange(TP)[:, None]
    valid = t_idx <= (L - fs_pad)[None, :]
    mb = jnp.where(valid, cb_pad[None, :], -1e30).astype(jnp.float32)   # (TP,128)

    return {
        "emb": params["emb"].astype(jnp.bfloat16),            # bf16 gather table
        "w_taps": w_taps,
        "mb": mb,
        "lin_w": params["lin_w"].astype(jnp.float32),
        "lin_b": params["lin_b"].astype(jnp.float32),
        "Lp": Lp,
    }


@partial(jax.jit, static_argnames=("Lp",))
def cnn_forward(x_ids, emb_table, w_taps, mb, lin_w, lin_b, *, Lp):
    B, L = x_ids.shape
    TP = mb.shape[0]

    # Per-call XLA glue: bf16 embedding gather + zero pad (no im2col).
    emb = emb_table[x_ids]                                    # (B, L, 128) bf16
    emb_p = jnp.pad(emb, ((0, 0), (0, Lp - L), (0, 0)))       # (B, Lp, 128)

    flops = 2 * B * Lp * EMB_DIM * NCOL
    bytes_accessed = (emb_p.size * 2 + w_taps.size * 2 + mb.size * 4
                      + B * NFP * 4)

    feats = pl.pallas_call(
        cnn_kernel,
        grid=(B,),
        in_specs=[
            pl.BlockSpec((1, Lp, EMB_DIM), lambda b: (b, 0, 0)),
            pl.BlockSpec((EMB_DIM, NCOL), lambda b: (0, 0)),   # resident weights
            pl.BlockSpec((TP, NFP), lambda b: (0, 0)),         # resident mask
        ],
        out_specs=pl.BlockSpec((1, 1, NFP), lambda b: (b, 0, 0)),
        out_shape=jax.ShapeDtypeStruct((B, 1, NFP), jnp.float32),
        compiler_params=pltpu.CompilerParams(
            dimension_semantics=("parallel",)),
        cost_estimate=pl.CostEstimate(flops=flops, transcendentals=0,
                                      bytes_accessed=bytes_accessed),
    )(emb_p, w_taps, mb)

    # Tiny linear head in the wrapper; padded lanes (18..127) never reach it.
    feats = feats[:, 0, :NF]                                  # (B, 18) f32
    return feats @ lin_w.T + lin_b


def ref_forward(x_ids, params):
    """Pure-JAX (f32) mirror of the PyTorch forward, for correctness check."""
    emb = params["emb"][x_ids]                                # (B, L, 128)
    B, L, _ = emb.shape
    feats = []
    for f, fs in enumerate(FILTER_SIZES):
        w = params["conv_w"][f]                               # (fs, 128)
        T = L - fs + 1
        vals = [jnp.sum(emb[:, t:t + fs, :] * w[None], axis=(1, 2))
                + params["conv_b"][f] for t in range(T)]
        feats.append(jnp.max(jnp.stack(vals, axis=1), axis=1))   # (B,)
    feat = jnp.stack(feats, axis=1)                           # (B, NF)
    return feat @ params["lin_w"].T + params["lin_b"]


def init_params(key, vocab_size):
    ks = jax.random.split(key, 3 + NF)
    emb = 0.1 * jax.random.normal(ks[0], (vocab_size + 1, EMB_DIM), jnp.float32)
    emb = emb.at[vocab_size].set(0.0)          # padding_idx row
    conv_w = [0.1 * jax.random.normal(ks[3 + f], (fs, EMB_DIM), jnp.float32)
              for f, fs in enumerate(FILTER_SIZES)]
    conv_b = 0.1 * jax.random.normal(ks[1], (NF,), jnp.float32)
    lin_w = 0.1 * jax.random.normal(ks[2], (2, NF), jnp.float32)
    lin_b = jnp.zeros((2,), jnp.float32)
    return {"emb": emb, "conv_w": conv_w, "conv_b": conv_b,
            "lin_w": lin_w, "lin_b": lin_b}


if __name__ == "__main__":
    key = jax.random.PRNGKey(0)
    k_param, k_x = jax.random.split(key)

    vocab_size = 50
    B, L = 2, 24                                   # L >= max filter size (19)

    params = init_params(k_param, vocab_size)
    # token ids in [0, vocab_size]  (vocab_size == padding index)
    x_ids = jax.random.randint(k_x, (B, L), 0, vocab_size + 1, jnp.int32)

    prep = prepare_params(params, L)               # one-time packing (hoisted)

    out = jax.block_until_ready(
        cnn_forward(x_ids, prep["emb"], prep["w_taps"], prep["mb"],
                    prep["lin_w"], prep["lin_b"], Lp=prep["Lp"]))
    ref = jax.block_until_ready(ref_forward(x_ids, params))

    assert out.shape == (B, 2)
    # bf16 operands (f32 accumulation) => ~1e-2 relative error vs the f32 ref.
    assert jnp.allclose(out, ref, rtol=2e-2, atol=2e-2), (out, ref)

    print("KERNEL_OK")
</pallas_src>

<mosaic_0001>
module attributes {stable_mosaic.version = 11 : i64} {
  func.func @cnn_kernel(%arg0: i32, %arg1: memref<1x48x128xbf16, #tpu.memory_space<vmem>>, %arg2: memref<128x2432xbf16, #tpu.memory_space<vmem>>, %arg3: memref<24x128xf32, #tpu.memory_space<vmem>>, %arg4: memref<1x1x128xf32, #tpu.memory_space<vmem>>) attributes {dimension_semantics = [#tpu.dimension_semantics<parallel>], iteration_bounds = array<i64: 2>, scalar_prefetch = 0 : i64, scratch_operands = 0 : i64, tpu.core_type = #tpu.core_type<tc>, window_params = [{transform_indices = @transform_0, window_bounds = array<i64: 1, 48, 128>}, {pipeline_mode = #tpu.pipeline_mode<synchronous>, transform_indices = @transform_1, window_bounds = array<i64: 128, 2432>}, {pipeline_mode = #tpu.pipeline_mode<synchronous>, transform_indices = @transform_2, window_bounds = array<i64: 24, 128>}, {transform_indices = @transform_3, window_bounds = array<i64: 1, 1, 128>}]} {
    %c0 = arith.constant 0 : index
    %c0_0 = arith.constant 0 : index
    %c0_1 = arith.constant 0 : index
    %0 = vector.load %arg1[%c0, %c0_0, %c0_1] : memref<1x48x128xbf16, #tpu.memory_space<vmem>>, vector<1x48x128xbf16>
    %1 = vector.shape_cast %0 : vector<1x48x128xbf16> to vector<48x128xbf16>
    %c0_2 = arith.constant 0 : index
    %c0_3 = arith.constant 0 : index
    %2 = vector.load %arg2[%c0_2, %c0_3] : memref<128x2432xbf16, #tpu.memory_space<vmem>>, vector<128x2432xbf16>
    %cst = arith.constant dense<0.000000e+00> : vector<48x2432xf32>
    %3 = tpu.matmul %1, %2, %cst {dimension_numbers = #tpu.dot_dimension_numbers<[1], [0], [0], [1], [0, 0, 1, 1], [], []>} : vector<48x128xbf16>, vector<128x2432xbf16>, vector<48x2432xf32> -> vector<48x2432xf32>
    %c0_4 = arith.constant 0 : index
    %c0_5 = arith.constant 0 : index
    %4 = vector.load %arg3[%c0_4, %c0_5] : memref<24x128xf32, #tpu.memory_space<vmem>>, vector<24x128xf32>
    %5 = vector.extract_strided_slice %3 {offsets = [0, 0], sizes = [24, 128], strides = [1, 1]} : vector<48x2432xf32> to vector<24x128xf32>
    %6 = arith.addf %4, %5 : vector<24x128xf32>
    %7 = vector.extract_strided_slice %3 {offsets = [1, 128], sizes = [24, 128], strides = [1, 1]} : vector<48x2432xf32> to vector<24x128xf32>
    %8 = arith.addf %6, %7 : vector<24x128xf32>
    %9 = vector.extract_strided_slice %3 {offsets = [2, 256], sizes = [24, 128], strides = [1, 1]} : vector<48x2432xf32> to vector<24x128xf32>
    %10 = arith.addf %8, %9 : vector<24x128xf32>
    %11 = vector.extract_strided_slice %3 {offsets = [3, 384], sizes = [24, 128], strides = [1, 1]} : vector<48x2432xf32> to vector<24x128xf32>
    %12 = arith.addf %10, %11 : vector<24x128xf32>
    %13 = vector.extract_strided_slice %3 {offsets = [4, 512], sizes = [24, 128], strides = [1, 1]} : vector<48x2432xf32> to vector<24x128xf32>
    %14 = arith.addf %12, %13 : vector<24x128xf32>
    %15 = vector.extract_strided_slice %3 {offsets = [5, 640], sizes = [24, 128], strides = [1, 1]} : vector<48x2432xf32> to vector<24x128xf32>
    %16 = arith.addf %14, %15 : vector<24x128xf32>
    %17 = vector.extract_strided_slice %3 {offsets = [6, 768], sizes = [24, 128], strides = [1, 1]} : vector<48x2432xf32> to vector<24x128xf32>
    %18 = arith.addf %16, %17 : vector<24x128xf32>
    %19 = vector.extract_strided_slice %3 {offsets = [7, 896], sizes = [24, 128], strides = [1, 1]} : vector<48x2432xf32> to vector<24x128xf32>
    %20 = arith.addf %18, %19 : vector<24x128xf32>
    %21 = vector.extract_strided_slice %3 {offsets = [8, 1024], sizes = [24, 128], strides = [1, 1]} : vector<48x2432xf32> to vector<24x128xf32>
    %22 = arith.addf %20, %21 : vector<24x128xf32>
    %23 = vector.extract_strided_slice %3 {offsets = [9, 1152], sizes = [24, 128], strides = [1, 1]} : vector<48x2432xf32> to vector<24x128xf32>
    %24 = arith.addf %22, %23 : vector<24x128xf32>
    %25 = vector.extract_strided_slice %3 {offsets = [10, 1280], sizes = [24, 128], strides = [1, 1]} : vector<48x2432xf32> to vector<24x128xf32>
    %26 = arith.addf %24, %25 : vector<24x128xf32>
    %27 = vector.extract_strided_slice %3 {offsets = [11, 1408], sizes = [24, 128], strides = [1, 1]} : vector<48x2432xf32> to vector<24x128xf32>
    %28 = arith.addf %26, %27 : vector<24x128xf32>
    %29 = vector.extract_strided_slice %3 {offsets = [12, 1536], sizes = [24, 128], strides = [1, 1]} : vector<48x2432xf32> to vector<24x128xf32>
    %30 = arith.addf %28, %29 : vector<24x128xf32>
    %31 = vector.extract_strided_slice %3 {offsets = [13, 1664], sizes = [24, 128], strides = [1, 1]} : vector<48x2432xf32> to vector<24x128xf32>
    %32 = arith.addf %30, %31 : vector<24x128xf32>
    %33 = vector.extract_strided_slice %3 {offsets = [14, 1792], sizes = [24, 128], strides = [1, 1]} : vector<48x2432xf32> to vector<24x128xf32>
    %34 = arith.addf %32, %33 : vector<24x128xf32>
    %35 = vector.extract_strided_slice %3 {offsets = [15, 1920], sizes = [24, 128], strides = [1, 1]} : vector<48x2432xf32> to vector<24x128xf32>
    %36 = arith.addf %34, %35 : vector<24x128xf32>
    %37 = vector.extract_strided_slice %3 {offsets = [16, 2048], sizes = [24, 128], strides = [1, 1]} : vector<48x2432xf32> to vector<24x128xf32>
    %38 = arith.addf %36, %37 : vector<24x128xf32>
    %39 = vector.extract_strided_slice %3 {offsets = [17, 2176], sizes = [24, 128], strides = [1, 1]} : vector<48x2432xf32> to vector<24x128xf32>
    %40 = arith.addf %38, %39 : vector<24x128xf32>
    %41 = vector.extract_strided_slice %3 {offsets = [18, 2304], sizes = [24, 128], strides = [1, 1]} : vector<48x2432xf32> to vector<24x128xf32>
    %42 = arith.addf %40, %41 : vector<24x128xf32>
    %cst_6 = arith.constant dense<0xFF800000> : vector<128xf32>
    %43 = vector.multi_reduction <maximumf>, %42, %cst_6 [0] : vector<24x128xf32> to vector<128xf32>
    %44 = vector.shape_cast %43 : vector<128xf32> to vector<1x128xf32>
    %c0_7 = arith.constant 0 : index
    %c0_8 = arith.constant 0 : index
    %c0_9 = arith.constant 0 : index
    %45 = vector.load %arg4[%c0_7, %c0_8, %c0_9] : memref<1x1x128xf32, #tpu.memory_space<vmem>>, vector<1x1x128xf32>
    %46 = vector.shape_cast %45 : vector<1x1x128xf32> to vector<1x128xf32>
    %47 = vector.shape_cast %44 : vector<1x128xf32> to vector<1x1x128xf32>
    tpu.vector_store %arg4[%c0_7, %c0_8, %c0_9], %47 {strides = array<i32>} : memref<1x1x128xf32, #tpu.memory_space<vmem>>, vector<1x1x128xf32>,
    return
  }
  func.func @transform_0(%arg0: i32) -> (i32, i32, i32) {
    %c0_i32 = arith.constant 0 : i32
    %c0_i32_0 = arith.constant 0 : i32
    %c0_i32_1 = arith.constant 0 : i32
    return %arg0, %c0_i32, %c0_i32_0 : i32, i32, i32
  }
  func.func @transform_1(%arg0: i32) -> (i32, i32) {
    %c0_i32 = arith.constant 0 : i32
    %c0_i32_0 = arith.constant 0 : i32
    %c0_i32_1 = arith.constant 0 : i32
    return %c0_i32, %c0_i32_0 : i32, i32
  }
  func.func @transform_2(%arg0: i32) -> (i32, i32) {
    %c0_i32 = arith.constant 0 : i32
    %c0_i32_0 = arith.constant 0 : i32
    %c0_i32_1 = arith.constant 0 : i32
    return %c0_i32, %c0_i32_0 : i32, i32
  }
  func.func @transform_3(%arg0: i32) -> (i32, i32, i32) {
    %c0_i32 = arith.constant 0 : i32
    %c0_i32_0 = arith.constant 0 : i32
    %c0_i32_1 = arith.constant 0 : i32
    return %arg0, %c0_i32, %c0_i32_0 : i32, i32, i32
  }
}

</mosaic_0001>

<llo_original>
// kernel: cnn_forward.1
$region0: #{cnn_forward.1}
  #allocation0 [shape = 'u32[]', space=smem, size = 0x4, offset = 0x4, fixed_abs, tag = 'smem constant byte address 0x4 - core index']
  #allocation1 [shape = 'u32[72,128]{1,0:T(1,128)}', space=vmem, size = 0x9000, scoped, tag = 'internal scratch']
  %s0 = inlined_call_operand.vmem [shape: bf16[2,48,128], index: 0, kind: input, shape index: {}]
  %s1 = inlined_call_operand.hbm [shape: bf16[128,2432], index: 1, kind: input, shape index: {}]
  %s2 = inlined_call_operand.vmem [shape: f32[24,128], index: 2, kind: input, shape index: {}]
  %s3 = inlined_call_operand.vmem [shape: f32[2,1,128], index: 3, kind: output, shape index: {}]
  %s4 = sld [smem:[#allocation0]]
  $region49: #{cnn_forward.1} parent=0
    _
  %s6 = ssub.s32 1, %s4
  %s7 = scalar_select 0, %s6, %s4
  $region1: #{cnn_forward.1} parent=0
    #allocation2 [shape = 'u8[622592]{0}', space=vmem, size = 0x98000, scoped, tag = 'input window, operand 1, single buffered']
    #allocation3 [shape = 's32[2]{0}', space=sflag, size = 0x8, scoped, tag = 'scoped memory for cnn_forward.1']
    %8 = vsyncpa [#allocation3], 0
    loop: start=0, step=1, limit=4
    $region2: #{cnn_forward.1} parent=1 // loop_pre_header
      _
    $region3: #{cnn_forward.1} parent=1 // loop_header
      %s10 = sphi 0, %s14
      %p11 = scmp.ge.s32.totalorder %s10, 4
      %s20 = sphi 0, %s22
      %s23 = sphi 0, %s20
      %s24 = sphi 0, %s23
      %s40 = sphi 0, %s24
      %s44 = sphi 0, %s44
      %s46 = sphi 0, %s44
      %s47 = sphi 0, %s46
      %s61 = sphi 0, %s47
      %s65 = sphi 0, %s65
      %s67 = sphi 0, %s65
      %s68 = sphi 0, %s67
      %s82 = sphi 0, %s68
      %s88 = sphi 0, %s90
      %s91 = sphi 0, %s88
      %s92 = sphi 0, %s91
      %s108 = sphi 0, %s92
    $region4: #{cnn_forward.1} parent=1 // loop_header_branch
      %13 = sbr.rel (%p11) target = $region8
    $region5: #{cnn_forward.1} parent=1 // loop_body
      %s15 = ssub.s32 %s10, 1
      %s16 = ssub.s32 %s10, 2
      %s17 = sadd.s32 %s10, 1
      %s18 = ssub.s32 %s10, %s17
      %p19 = scmp.eq.s32.totalorder %s18, 0
      %s21 = sadd.s32 %s20, 1
      %s22 = scalar_select %p19, %s20, %s21
      %p25 = pneg %p19
      %p26 = scmp.eq.s32.totalorder %s10, 1
      %p27 = por %p25, %p26
      %p28 = scmp.ne.s32.totalorder %s20, %s23
      %p29 = scmp.eq.s32.totalorder %s10, 0
      %p30 = por %p28, %p29
      %p31 = scmp.ne.s32.totalorder %s20, %s23
      %p32 = scmp.eq.s32.totalorder %s15, 1
      %p33 = por %p31, %p32
      %p34 = scmp.ne.s32.totalorder %s23, %s24
      %p35 = scmp.eq.s32.totalorder %s15, 0
      %p36 = por %p34, %p35
      %p37 = scmp.ne.s32.totalorder %s23, %s24
      %p38 = scmp.eq.s32.totalorder %s16, 1
      %p39 = por %p37, %p38
      %p41 = scmp.ne.s32.totalorder %s24, %s40
      %p42 = scmp.eq.s32.totalorder %s16, 0
      %p43 = por %p41, %p42
      %s45 = sadd.s32 %s44, 1
      %p48 = scmp.eq.s32.totalorder %s10, 1
      %p49 = scmp.ne.s32.totalorder %s44, %s46
      %p50 = scmp.eq.s32.totalorder %s10, 0
      %p51 = por %p49, %p50
      %p52 = scmp.ne.s32.totalorder %s44, %s46
      %p53 = scmp.eq.s32.totalorder %s15, 1
      %p54 = por %p52, %p53
      %p55 = scmp.ne.s32.totalorder %s46, %s47
      %p56 = scmp.eq.s32.totalorder %s15, 0
      %p57 = por %p55, %p56
      %p58 = scmp.ne.s32.totalorder %s46, %s47
      %p59 = scmp.eq.s32.totalorder %s16, 1
      %p60 = por %p58, %p59
      %p62 = scmp.ne.s32.totalorder %s47, %s61
      %p63 = scmp.eq.s32.totalorder %s16, 0
      %p64 = por %p62, %p63
      %s66 = sadd.s32 %s65, 1
      %p69 = scmp.eq.s32.totalorder %s10, 1
      %p70 = scmp.ne.s32.totalorder %s65, %s67
      %p71 = scmp.eq.s32.totalorder %s10, 0
      %p72 = por %p70, %p71
      %p73 = scmp.ne.s32.totalorder %s65, %s67
      %p74 = scmp.eq.s32.totalorder %s15, 1
      %p75 = por %p73, %p74
      %p76 = scmp.ne.s32.totalorder %s67, %s68
      %p77 = scmp.eq.s32.totalorder %s15, 0
      %p78 = por %p76, %p77
      %p79 = scmp.ne.s32.totalorder %s67, %s68
      %p80 = scmp.eq.s32.totalorder %s16, 1
      %p81 = por %p79, %p80
      %p83 = scmp.ne.s32.totalorder %s68, %s82
      %p84 = scmp.eq.s32.totalorder %s16, 0
      %p85 = por %p83, %p84
      %s86 = ssub.s32 %s10, %s17
      %p87 = scmp.eq.s32.totalorder %s86, 0
      %s89 = sadd.s32 %s88, 1
      %s90 = scalar_select %p87, %s88, %s89
      %p93 = pneg %p87
      %p94 = scmp.eq.s32.totalorder %s10, 1
      %p95 = por %p93, %p94
      %p96 = scmp.ne.s32.totalorder %s88, %s91
      %p97 = scmp.eq.s32.totalorder %s10, 0
      %p98 = por %p96, %p97
      %p99 = scmp.ne.s32.totalorder %s88, %s91
      %p100 = scmp.eq.s32.totalorder %s15, 1
      %p101 = por %p99, %p100
      %p102 = scmp.ne.s32.totalorder %s91, %s92
      %p103 = scmp.eq.s32.totalorder %s15, 0
      %p104 = por %p102, %p103
      %p105 = scmp.ne.s32.totalorder %s91, %s92
      %p106 = scmp.eq.s32.totalorder %s16, 1
      %p107 = por %p105, %p106
      %p109 = scmp.ne.s32.totalorder %s92, %s108
      %p110 = scmp.eq.s32.totalorder %s16, 0
      %p111 = por %p109, %p110
      %p112 = scmp.le.s32.totalorder 1, %s10
      %p113 = scmp.lt.s32.totalorder %s10, 3
      %p114 = pnand %p112, %p113
      %p115 = pneg %p114
      // Predicated region
      $region9: #{cnn_forward.1} parent=5 // pred_check
        _
      $region10: #{cnn_forward.1} parent=5 // pred_check_branch
        %117 = sbr.rel (%p114) target = $region12
      $region11: #{cnn_forward.1} parent=5 // pred_region
        %s118 = ssub.s32 %s10, 1
        // Predicated region
        $region13: #{cnn_forward.1} parent=11 // pred_check
          %p119 = pneg %p57
        $region14: #{cnn_forward.1} parent=11 // pred_check_branch
          %121 = sbr.rel (%p119) target = $region16
        $region15: #{cnn_forward.1} parent=11 // pred_region
          %123 = vsyncadd [#allocation3], 0
          %s124 = sshll.u32 %s1, 4
          %s125 = int_to_ptr.hbm [resolvable:$true] %s124
          %s126 = sshll.u32 [#allocation2], 4
          %s127 = int_to_ptr.vmem [resolvable:$true] %s126
          %132 = dma.hbm_to_vmem [thread:$0]  %s125, 19456, %s127, [#allocation3], 1216, 1216, 76
        $region16: #{cnn_forward.1} parent=11 // pred_fallthru
          _
        // Predicated region
        $region17: #{cnn_forward.1} parent=11 // pred_check
          %p133 = pneg %p78
        $region18: #{cnn_forward.1} parent=11 // pred_check_branch
          %135 = sbr.rel (%p133) target = $region20
        $region19: #{cnn_forward.1} parent=11 // pred_region
          _
        $region20: #{cnn_forward.1} parent=11 // pred_fallthru
          _
      $region12: #{cnn_forward.1} parent=5 // pred_fallthru
        _
      %p136 = scmp.lt.s32.totalorder %s10, 2
      // Predicated region
      $region21: #{cnn_forward.1} parent=5 // pred_check
        %p137 = pneg %p136
      $region22: #{cnn_forward.1} parent=5 // pred_check_branch
        %139 = sbr.rel (%p137) target = $region24
      $region23: #{cnn_forward.1} parent=5 // pred_region
        // Predicated region
        $region25: #{cnn_forward.1} parent=23 // pred_check
          %p140 = pneg %p30
        $region26: #{cnn_forward.1} parent=23 // pred_check_branch
          %142 = sbr.rel (%p140) target = $region28
        $region27: #{cnn_forward.1} parent=23 // pred_region
          %p143 = scmp.lt.s32.totalorder %s10, 1
          %s144 = scalar_select %p143, %s10, 1
          %s145 = smul.addr %s144, 6
          %s146 = smul.addr %s145, 4
          %s147 = scalar_lea.vmem %s0, %s146
        $region28: #{cnn_forward.1} parent=23 // pred_fallthru
          _
      $region24: #{cnn_forward.1} parent=5 // pred_fallthru
        _
      %p148 = scmp.le.s32.totalorder 1, %s10
      %p149 = scmp.lt.s32.totalorder %s10, 3
      %p150 = pnand %p148, %p149
      %p151 = pneg %p150
      // Predicated region
      $region29: #{cnn_forward.1} parent=5 // pred_check
        _
      $region30: #{cnn_forward.1} parent=5 // pred_check_branch
        %153 = sbr.rel (%p150) target = $region32
      $region31: #{cnn_forward.1} parent=5 // pred_region
        %s154 = ssub.s32 %s10, 1
        // Predicated region
        $region33: #{cnn_forward.1} parent=31 // pred_check
          %p155 = pneg %p57
        $region34: #{cnn_forward.1} parent=31 // pred_check_branch
          %157 = sbr.rel (%p155) target = $region36
        $region35: #{cnn_forward.1} parent=31 // pred_region
          %159 = dma.done [#allocation3], 19456
        $region36: #{cnn_forward.1} parent=31 // pred_fallthru
          _
        %p160 = scmp.lt.s32.totalorder %s15, 1
        %s161 = scalar_select %p160, %s15, 1
        %s162 = smul.addr %s161, 6
        %s163 = smul.addr %s162, 4
        %s164 = scalar_lea.vmem %s0, %s163
        %p165 = pneg %p36
        %p166 = pneg %p33
        %p167 = pneg %p57
        %p168 = pneg %p54
        %p169 = pneg %p78
        %p170 = pneg %p75
        %p171 = pneg %p104
        %p172 = pneg %p101
        %p173 = scmp.lt.s32.totalorder %s15, 1
        %s174 = scalar_select %p173, %s15, 1
        %s175 = scalar_lea.vmem %s3, %s174
        %p176 = scmp.lt.s32.totalorder %s15, 1
        %s177 = scalar_select %p176, %s15, 1
        %s178 = smul.addr %s177, 6
        %s179 = smul.addr %s178, 4
        %s180 = scalar_lea.vmem %s0, %s179
        %p181 = scmp.lt.s32.totalorder %s15, 1
        %s182 = scalar_select %p181, %s15, 1
        %s183 = scalar_lea.vmem %s3, %s182
        %v184 = vld [vmem:[%s180] sm:$0xf]
        %v185 = vld [vmem:[%s180 + $0x4] sm:$0xf]
        %v186 = vld [vmem:[%s180 + $0x8] sm:$0xf]
        %v187 = vld [vmem:[%s180 + $0xc] sm:$0xf]
        %v188 = vld [vmem:[%s180 + $0x10] sm:$0xf]
        %v189 = vld [vmem:[%s180 + $0x14] sm:$0xf]
        %v190 = vld [vmem:[#allocation2] sm:$0xff]
        %v191 = vld [vmem:[#allocation2 + $0x8] sm:$0xff]
        %v192 = vld [vmem:[#allocation2 + $0x10] sm:$0xff]
        %v193 = vld [vmem:[#allocation2 + $0x18] sm:$0xff]
        %v194 = vld [vmem:[#allocation2 + $0x20] sm:$0xff]
        %v195 = vld [vmem:[#allocation2 + $0x28] sm:$0xff]
        %v196 = vld [vmem:[#allocation2 + $0x30] sm:$0xff]
        %v197 = vld [vmem:[#allocation2 + $0x38] sm:$0xff]
        %v198 = vld [vmem:[#allocation2 + $0x40] sm:$0xff]
        %v199 = vld [vmem:[#allocation2 + $0x48] sm:$0xf]
        %v200 = vld [vmem:[#allocation2 + $0x4c] sm:$0xff]
        %v201 = vld [vmem:[#allocation2 + $0x54] sm:$0xff]
        %v202 = vld [vmem:[#allocation2 + $0x5c] sm:$0xff]
        %v203 = vld [vmem:[#allocation2 + $0x64] sm:$0xff]
        %v204 = vld [vmem:[#allocation2 + $0x6c] sm:$0xff]
        %v205 = vld [vmem:[#allocation2 + $0x74] sm:$0xff]
        %v206 = vld [vmem:[#allocation2 + $0x7c] sm:$0xff]
        %v207 = vld [vmem:[#allocation2 + $0x84] sm:$0xff]
        %v208 = vld [vmem:[#allocation2 + $0x8c] sm:$0xff]
        %v209 = vld [vmem:[#allocation2 + $0x94] sm:$0xf]
        %v210 = vld [vmem:[#allocation2 + $0x98] sm:$0xff]
        %v211 = vld [vmem:[#allocation2 + $0xa0] sm:$0xff]
        %v212 = vld [vmem:[#allocation2 + $0xa8] sm:$0xff]
        %v213 = vld [vmem:[#allocation2 + $0xb0] sm:$0xff]
        %v214 = vld [vmem:[#allocation2 + $0xb8] sm:$0xff]
        %v215 = vld [vmem:[#allocation2 + $0xc0] sm:$0xff]
        %v216 = vld [vmem:[#allocation2 + $0xc8] sm:$0xff]
        %v217 = vld [vmem:[#allocation2 + $0xd0] sm:$0xff]
        %v218 = vld [vmem:[#allocation2 + $0xd8] sm:$0xff]
        %v219 = vld [vmem:[#allocation2 + $0xe0] sm:$0xf]
        %v220 = vld [vmem:[#allocation2 + $0xe4] sm:$0xff]
        %v221 = vld [vmem:[#allocation2 + $0xec] sm:$0xff]
        %v222 = vld [vmem:[#allocation2 + $0xf4] sm:$0xff]
        %v223 = vld [vmem:[#allocation2 + $0xfc] sm:$0xff]
        %v224 = vld [vmem:[#allocation2 + $0x104] sm:$0xff]
        %v225 = vld [vmem:[#allocation2 + $0x10c] sm:$0xff]
        %v226 = vld [vmem:[#allocation2 + $0x114] sm:$0xff]
        %v227 = vld [vmem:[#allocation2 + $0x11c] sm:$0xff]
        %v228 = vld [vmem:[#allocation2 + $0x124] sm:$0xff]
        %v229 = vld [vmem:[#allocation2 + $0x12c] sm:$0xf]
        %v230 = vld [vmem:[#allocation2 + $0x130] sm:$0xff]
        %v231 = vld [vmem:[#allocation2 + $0x138] sm:$0xff]
        %v232 = vld [vmem:[#allocation2 + $0x140] sm:$0xff]
        %v233 = vld [vmem:[#allocation2 + $0x148] sm:$0xff]
        %v234 = vld [vmem:[#allocation2 + $0x150] sm:$0xff]
        %v235 = vld [vmem:[#allocation2 + $0x158] sm:$0xff]
        %v236 = vld [vmem:[#allocation2 + $0x160] sm:$0xff]
        %v237 = vld [vmem:[#allocation2 + $0x168] sm:$0xff]
        %v238 = vld [vmem:[#allocation2 + $0x170] sm:$0xff]
        %v239 = vld [vmem:[#allocation2 + $0x178] sm:$0xf]
        %v240 = vld [vmem:[#allocation2 + $0x17c] sm:$0xff]
        %v241 = vld [vmem:[#allocation2 + $0x184] sm:$0xff]
        %v242 = vld [vmem:[#allocation2 + $0x18c] sm:$0xff]
        %v243 = vld [vmem:[#allocation2 + $0x194] sm:$0xff]
        %v244 = vld [vmem:[#allocation2 + $0x19c] sm:$0xff]
        %v245 = vld [vmem:[#allocation2 + $0x1a4] sm:$0xff]
        %v246 = vld [vmem:[#allocation2 + $0x1ac] sm:$0xff]
        %v247 = vld [vmem:[#allocation2 + $0x1b4] sm:$0xff]
        %v248 = vld [vmem:[#allocation2 + $0x1bc] sm:$0xff]
        %v249 = vld [vmem:[#allocation2 + $0x1c4] sm:$0xf]
        %v250 = vld [vmem:[#allocation2 + $0x1c8] sm:$0xff]
        %v251 = vld [vmem:[#allocation2 + $0x1d0] sm:$0xff]
        %v252 = vld [vmem:[#allocation2 + $0x1d8] sm:$0xff]
        %v253 = vld [vmem:[#allocation2 + $0x1e0] sm:$0xff]
        %v254 = vld [vmem:[#allocation2 + $0x1e8] sm:$0xff]
        %v255 = vld [vmem:[#allocation2 + $0x1f0] sm:$0xff]
        %v256 = vld [vmem:[#allocation2 + $0x1f8] sm:$0xff]
        %v257 = vld [vmem:[#allocation2 + $0x200] sm:$0xff]
        %v258 = vld [vmem:[#allocation2 + $0x208] sm:$0xff]
        %v259 = vld [vmem:[#allocation2 + $0x210] sm:$0xf]
        %v260 = vld [vmem:[#allocation2 + $0x214] sm:$0xff]
        %v261 = vld [vmem:[#allocation2 + $0x21c] sm:$0xff]
        %v262 = vld [vmem:[#allocation2 + $0x224] sm:$0xff]
        %v263 = vld [vmem:[#allocation2 + $0x22c] sm:$0xff]
        %v264 = vld [vmem:[#allocation2 + $0x234] sm:$0xff]
        %v265 = vld [vmem:[#allocation2 + $0x23c] sm:$0xff]
        %v266 = vld [vmem:[#allocation2 + $0x244] sm:$0xff]
        %v267 = vld [vmem:[#allocation2 + $0x24c] sm:$0xff]
        %v268 = vld [vmem:[#allocation2 + $0x254] sm:$0xff]
        %v269 = vld [vmem:[#allocation2 + $0x25c] sm:$0xf]
        %v270 = vld [vmem:[#allocation2 + $0x260] sm:$0xff]
        %v271 = vld [vmem:[#allocation2 + $0x268] sm:$0xff]
        %v272 = vld [vmem:[#allocation2 + $0x270] sm:$0xff]
        %v273 = vld [vmem:[#allocation2 + $0x278] sm:$0xff]
        %v274 = vld [vmem:[#allocation2 + $0x280] sm:$0xff]
        %v275 = vld [vmem:[#allocation2 + $0x288] sm:$0xff]
        %v276 = vld [vmem:[#allocation2 + $0x290] sm:$0xff]
        %v277 = vld [vmem:[#allocation2 + $0x298] sm:$0xff]
        %v278 = vld [vmem:[#allocation2 + $0x2a0] sm:$0xff]
        %v279 = vld [vmem:[#allocation2 + $0x2a8] sm:$0xf]
        %v280 = vld [vmem:[#allocation2 + $0x2ac] sm:$0xff]
        %v281 = vld [vmem:[#allocation2 + $0x2b4] sm:$0xff]
        %v282 = vld [vmem:[#allocation2 + $0x2bc] sm:$0xff]
        %v283 = vld [vmem:[#allocation2 + $0x2c4] sm:$0xff]
        %v284 = vld [vmem:[#allocation2 + $0x2cc] sm:$0xff]
        %v285 = vld [vmem:[#allocation2 + $0x2d4] sm:$0xff]
        %v286 = vld [vmem:[#allocation2 + $0x2dc] sm:$0xff]
        %v287 = vld [vmem:[#allocation2 + $0x2e4] sm:$0xff]
        %v288 = vld [vmem:[#allocation2 + $0x2ec] sm:$0xff]
        %v289 = vld [vmem:[#allocation2 + $0x2f4] sm:$0xf]
        %v290 = vld [vmem:[#allocation2 + $0x2f8] sm:$0xff]
        %v291 = vld [vmem:[#allocation2 + $0x300] sm:$0xff]
        %v292 = vld [vmem:[#allocation2 + $0x308] sm:$0xff]
        %v293 = vld [vmem:[#allocation2 + $0x310] sm:$0xff]
        %v294 = vld [vmem:[#allocation2 + $0x318] sm:$0xff]
        %v295 = vld [vmem:[#allocation2 + $0x320] sm:$0xff]
        %v296 = vld [vmem:[#allocation2 + $0x328] sm:$0xff]
        %v297 = vld [vmem:[#allocation2 + $0x330] sm:$0xff]
        %v298 = vld [vmem:[#allocation2 + $0x338] sm:$0xff]
        %v299 = vld [vmem:[#allocation2 + $0x340] sm:$0xf]
        %v300 = vld [vmem:[#allocation2 + $0x344] sm:$0xff]
        %v301 = vld [vmem:[#allocation2 + $0x34c] sm:$0xff]
        %v302 = vld [vmem:[#allocation2 + $0x354] sm:$0xff]
        %v303 = vld [vmem:[#allocation2 + $0x35c] sm:$0xff]
        %v304 = vld [vmem:[#allocation2 + $0x364] sm:$0xff]
        %v305 = vld [vmem:[#allocation2 + $0x36c] sm:$0xff]
        %v306 = vld [vmem:[#allocation2 + $0x374] sm:$0xff]
        %v307 = vld [vmem:[#allocation2 + $0x37c] sm:$0xff]
        %v308 = vld [vmem:[#allocation2 + $0x384] sm:$0xff]
        %v309 = vld [vmem:[#allocation2 + $0x38c] sm:$0xf]
        %v310 = vld [vmem:[#allocation2 + $0x390] sm:$0xff]
        %v311 = vld [vmem:[#allocation2 + $0x398] sm:$0xff]
        %v312 = vld [vmem:[#allocation2 + $0x3a0] sm:$0xff]
        %v313 = vld [vmem:[#allocation2 + $0x3a8] sm:$0xff]
        %v314 = vld [vmem:[#allocation2 + $0x3b0] sm:$0xff]
        %v315 = vld [vmem:[#allocation2 + $0x3b8] sm:$0xff]
        %v316 = vld [vmem:[#allocation2 + $0x3c0] sm:$0xff]
        %v317 = vld [vmem:[#allocation2 + $0x3c8] sm:$0xff]
        %v318 = vld [vmem:[#allocation2 + $0x3d0] sm:$0xff]
        %v319 = vld [vmem:[#allocation2 + $0x3d8] sm:$0xf]
        %v320 = vld [vmem:[#allocation2 + $0x3dc] sm:$0xff]
        %v321 = vld [vmem:[#allocation2 + $0x3e4] sm:$0xff]
        %v322 = vld [vmem:[#allocation2 + $0x3ec] sm:$0xff]
        %v323 = vld [vmem:[#allocation2 + $0x3f4] sm:$0xff]
        %v324 = vld [vmem:[#allocation2 + $0x3fc] sm:$0xff]
        %v325 = vld [vmem:[#allocation2 + $0x404] sm:$0xff]
        %v326 = vld [vmem:[#allocation2 + $0x40c] sm:$0xff]
        %v327 = vld [vmem:[#allocation2 + $0x414] sm:$0xff]
        %v328 = vld [vmem:[#allocation2 + $0x41c] sm:$0xff]
        %v329 = vld [vmem:[#allocation2 + $0x424] sm:$0xf]
        %v330 = vld [vmem:[#allocation2 + $0x428] sm:$0xff]
        %v331 = vld [vmem:[#allocation2 + $0x430] sm:$0xff]
        %v332 = vld [vmem:[#allocation2 + $0x438] sm:$0xff]
        %v333 = vld [vmem:[#allocation2 + $0x440] sm:$0xff]
        %v334 = vld [vmem:[#allocation2 + $0x448] sm:$0xff]
        %v335 = vld [vmem:[#allocation2 + $0x450] sm:$0xff]
        %v336 = vld [vmem:[#allocation2 + $0x458] sm:$0xff]
        %v337 = vld [vmem:[#allocation2 + $0x460] sm:$0xff]
        %v338 = vld [vmem:[#allocation2 + $0x468] sm:$0xff]
        %v339 = vld [vmem:[#allocation2 + $0x470] sm:$0xf]
        %v340 = vld [vmem:[#allocation2 + $0x474] sm:$0xff]
        %v341 = vld [vmem:[#allocation2 + $0x47c] sm:$0xff]
        %v342 = vld [vmem:[#allocation2 + $0x484] sm:$0xff]
        %v343 = vld [vmem:[#allocation2 + $0x48c] sm:$0xff]
        %v344 = vld [vmem:[#allocation2 + $0x494] sm:$0xff]
        %v345 = vld [vmem:[#allocation2 + $0x49c] sm:$0xff]
        %v346 = vld [vmem:[#allocation2 + $0x4a4] sm:$0xff]
        %v347 = vld [vmem:[#allocation2 + $0x4ac] sm:$0xff]
        %v348 = vld [vmem:[#allocation2 + $0x4b4] sm:$0xff]
        %v349 = vld [vmem:[#allocation2 + $0x4bc] sm:$0xf]
        %v356 = vunpack.c.l.b16 %v184
        %v357 = vunpack.c.l.b16 %v185
        %v358 = vunpack.c.l.b16 %v186
        %v359 = vunpack.c.l.b16 %v187
        %v360 = vunpack.c.l.b16 %v188
        %v361 = vunpack.c.l.b16 %v189
        %v362 = vpack.c.b16 %v357, %v356
        %v363 = vpack.c.b16 %v359, %v358
        %v364 = vpack.c.b16 %v361, %v360
        %v528 = vunpack.c.l.b16 %v190
        %v529 = vunpack.c.h.b16 %v190
        %v530 = vunpack.c.l.b16 %v191
        %v531 = vunpack.c.h.b16 %v191
        %v532 = vunpack.c.l.b16 %v192
        %v533 = vunpack.c.h.b16 %v192
        %v534 = vunpack.c.l.b16 %v193
        %v535 = vunpack.c.h.b16 %v193
        %v536 = vunpack.c.l.b16 %v194
        %v537 = vunpack.c.h.b16 %v194
        %v538 = vunpack.c.l.b16 %v195
        %v539 = vunpack.c.h.b16 %v195
        %v540 = vunpack.c.l.b16 %v196
        %v541 = vunpack.c.h.b16 %v196
        %v542 = vunpack.c.l.b16 %v197
        %v543 = vunpack.c.h.b16 %v197
        %v544 = vunpack.c.l.b16 %v198
        %v545 = vunpack.c.h.b16 %v198
        %v546 = vunpack.c.l.b16 %v199
        %v547 = vunpack.c.l.b16 %v200
        %v548 = vunpack.c.h.b16 %v200
        %v549 = vunpack.c.l.b16 %v201
        %v550 = vunpack.c.h.b16 %v201
        %v551 = vunpack.c.l.b16 %v202
        %v552 = vunpack.c.h.b16 %v202
        %v553 = vunpack.c.l.b16 %v203
        %v554 = vunpack.c.h.b16 %v203
        %v555 = vunpack.c.l.b16 %v204
        %v556 = vunpack.c.h.b16 %v204
        %v557 = vunpack.c.l.b16 %v205
        %v558 = vunpack.c.h.b16 %v205
        %v559 = vunpack.c.l.b16 %v206
        %v560 = vunpack.c.h.b16 %v206
        %v561 = vunpack.c.l.b16 %v207
        %v562 = vunpack.c.h.b16 %v207
        %v563 = vunpack.c.l.b16 %v208
        %v564 = vunpack.c.h.b16 %v208
        %v565 = vunpack.c.l.b16 %v209
        %v566 = vunpack.c.l.b16 %v210
        %v567 = vunpack.c.h.b16 %v210
        %v568 = vunpack.c.l.b16 %v211
        %v569 = vunpack.c.h.b16 %v211
        %v570 = vunpack.c.l.b16 %v212
        %v571 = vunpack.c.h.b16 %v212
        %v572 = vunpack.c.l.b16 %v213
        %v573 = vunpack.c.h.b16 %v213
        %v574 = vunpack.c.l.b16 %v214
        %v575 = vunpack.c.h.b16 %v214
        %v576 = vunpack.c.l.b16 %v215
        %v577 = vunpack.c.h.b16 %v215
        %v578 = vunpack.c.l.b16 %v216
        %v579 = vunpack.c.h.b16 %v216
        %v580 = vunpack.c.l.b16 %v217
        %v581 = vunpack.c.h.b16 %v217
        %v582 = vunpack.c.l.b16 %v218
        %v583 = vunpack.c.h.b16 %v218
        %v584 = vunpack.c.l.b16 %v219
        %v585 = vunpack.c.l.b16 %v220
        %v586 = vunpack.c.h.b16 %v220
        %v587 = vunpack.c.l.b16 %v221
        %v588 = vunpack.c.h.b16 %v221
        %v589 = vunpack.c.l.b16 %v222
        %v590 = vunpack.c.h.b16 %v222
        %v591 = vunpack.c.l.b16 %v223
        %v592 = vunpack.c.h.b16 %v223
        %v593 = vunpack.c.l.b16 %v224
        %v594 = vunpack.c.h.b16 %v224
        %v595 = vunpack.c.l.b16 %v225
        %v596 = vunpack.c.h.b16 %v225
        %v597 = vunpack.c.l.b16 %v226
        %v598 = vunpack.c.h.b16 %v226
        %v599 = vunpack.c.l.b16 %v227
        %v600 = vunpack.c.h.b16 %v227
        %v601 = vunpack.c.l.b16 %v228
        %v602 = vunpack.c.h.b16 %v228
        %v603 = vunpack.c.l.b16 %v229
        %v604 = vunpack.c.l.b16 %v230
        %v605 = vunpack.c.h.b16 %v230
        %v606 = vunpack.c.l.b16 %v231
        %v607 = vunpack.c.h.b16 %v231
        %v608 = vunpack.c.l.b16 %v232
        %v609 = vunpack.c.h.b16 %v232
        %v610 = vunpack.c.l.b16 %v233
        %v611 = vunpack.c.h.b16 %v233
        %v612 = vunpack.c.l.b16 %v234
        %v613 = vunpack.c.h.b16 %v234
        %v614 = vunpack.c.l.b16 %v235
        %v615 = vunpack.c.h.b16 %v235
        %v616 = vunpack.c.l.b16 %v236
        %v617 = vunpack.c.h.b16 %v236
        %v618 = vunpack.c.l.b16 %v237
        %v619 = vunpack.c.h.b16 %v237
        %v620 = vunpack.c.l.b16 %v238
        %v621 = vunpack.c.h.b16 %v238
        %v622 = vunpack.c.l.b16 %v239
        %v623 = vunpack.c.l.b16 %v240
        %v624 = vunpack.c.h.b16 %v240
        %v625 = vunpack.c.l.b16 %v241
        %v626 = vunpack.c.h.b16 %v241
        %v627 = vunpack.c.l.b16 %v242
        %v628 = vunpack.c.h.b16 %v242
        %v629 = vunpack.c.l.b16 %v243
        %v630 = vunpack.c.h.b16 %v243
        %v631 = vunpack.c.l.b16 %v244
        %v632 = vunpack.c.h.b16 %v244
        %v633 = vunpack.c.l.b16 %v245
        %v634 = vunpack.c.h.b16 %v245
        %v635 = vunpack.c.l.b16 %v246
        %v636 = vunpack.c.h.b16 %v246
        %v637 = vunpack.c.l.b16 %v247
        %v638 = vunpack.c.h.b16 %v247
        %v639 = vunpack.c.l.b16 %v248
        %v640 = vunpack.c.h.b16 %v248
        %v641 = vunpack.c.l.b16 %v249
        %v642 = vunpack.c.l.b16 %v250
        %v643 = vunpack.c.h.b16 %v250
        %v644 = vunpack.c.l.b16 %v251
        %v645 = vunpack.c.h.b16 %v251
        %v646 = vunpack.c.l.b16 %v252
        %v647 = vunpack.c.h.b16 %v252
        %v648 = vunpack.c.l.b16 %v253
        %v649 = vunpack.c.h.b16 %v253
        %v650 = vunpack.c.l.b16 %v254
        %v651 = vunpack.c.h.b16 %v254
        %v652 = vunpack.c.l.b16 %v255
        %v653 = vunpack.c.h.b16 %v255
        %v654 = vunpack.c.l.b16 %v256
        %v655 = vunpack.c.h.b16 %v256
        %v656 = vunpack.c.l.b16 %v257
        %v657 = vunpack.c.h.b16 %v257
        %v658 = vunpack.c.l.b16 %v258
        %v659 = vunpack.c.h.b16 %v258
        %v660 = vunpack.c.l.b16 %v259
        %v661 = vunpack.c.l.b16 %v260
        %v662 = vunpack.c.h.b16 %v260
        %v663 = vunpack.c.l.b16 %v261
        %v664 = vunpack.c.h.b16 %v261
        %v665 = vunpack.c.l.b16 %v262
        %v666 = vunpack.c.h.b16 %v262
        %v667 = vunpack.c.l.b16 %v263
        %v668 = vunpack.c.h.b16 %v263
        %v669 = vunpack.c.l.b16 %v264
        %v670 = vunpack.c.h.b16 %v264
        %v671 = vunpack.c.l.b16 %v265
        %v672 = vunpack.c.h.b16 %v265
        %v673 = vunpack.c.l.b16 %v266
        %v674 = vunpack.c.h.b16 %v266
        %v675 = vunpack.c.l.b16 %v267
        %v676 = vunpack.c.h.b16 %v267
        %v677 = vunpack.c.l.b16 %v268
        %v678 = vunpack.c.h.b16 %v268
        %v679 = vunpack.c.l.b16 %v269
        %v680 = vunpack.c.l.b16 %v270
        %v681 = vunpack.c.h.b16 %v270
        %v682 = vunpack.c.l.b16 %v271
        %v683 = vunpack.c.h.b16 %v271
        %v684 = vunpack.c.l.b16 %v272
        %v685 = vunpack.c.h.b16 %v272
        %v686 = vunpack.c.l.b16 %v273
        %v687 = vunpack.c.h.b16 %v273
        %v688 = vunpack.c.l.b16 %v274
        %v689 = vunpack.c.h.b16 %v274
        %v690 = vunpack.c.l.b16 %v275
        %v691 = vunpack.c.h.b16 %v275
        %v692 = vunpack.c.l.b16 %v276
        %v693 = vunpack.c.h.b16 %v276
        %v694 = vunpack.c.l.b16 %v277
        %v695 = vunpack.c.h.b16 %v277
        %v696 = vunpack.c.l.b16 %v278
        %v697 = vunpack.c.h.b16 %v278
        %v698 = vunpack.c.l.b16 %v279
        %v699 = vunpack.c.l.b16 %v280
        %v700 = vunpack.c.h.b16 %v280
        %v701 = vunpack.c.l.b16 %v281
        %v702 = vunpack.c.h.b16 %v281
        %v703 = vunpack.c.l.b16 %v282
        %v704 = vunpack.c.h.b16 %v282
        %v705 = vunpack.c.l.b16 %v283
        %v706 = vunpack.c.h.b16 %v283
        %v707 = vunpack.c.l.b16 %v284
        %v708 = vunpack.c.h.b16 %v284
        %v709 = vunpack.c.l.b16 %v285
        %v710 = vunpack.c.h.b16 %v285
        %v711 = vunpack.c.l.b16 %v286
        %v712 = vunpack.c.h.b16 %v286
        %v713 = vunpack.c.l.b16 %v287
        %v714 = vunpack.c.h.b16 %v287
        %v715 = vunpack.c.l.b16 %v288
        %v716 = vunpack.c.h.b16 %v288
        %v717 = vunpack.c.l.b16 %v289
        %v718 = vunpack.c.l.b16 %v290
        %v719 = vunpack.c.h.b16 %v290
        %v720 = vunpack.c.l.b16 %v291
        %v721 = vunpack.c.h.b16 %v291
        %v722 = vunpack.c.l.b16 %v292
        %v723 = vunpack.c.h.b16 %v292
        %v724 = vunpack.c.l.b16 %v293
        %v725 = vunpack.c.h.b16 %v293
        %v726 = vunpack.c.l.b16 %v294
        %v727 = vunpack.c.h.b16 %v294
        %v728 = vunpack.c.l.b16 %v295
        %v729 = vunpack.c.h.b16 %v295
        %v730 = vunpack.c.l.b16 %v296
        %v731 = vunpack.c.h.b16 %v296
        %v732 = vunpack.c.l.b16 %v297
        %v733 = vunpack.c.h.b16 %v297
        %v734 = vunpack.c.l.b16 %v298
        %v735 = vunpack.c.h.b16 %v298
        %v736 = vunpack.c.l.b16 %v299
        %v737 = vunpack.c.l.b16 %v300
        %v738 = vunpack.c.h.b16 %v300
        %v739 = vunpack.c.l.b16 %v301
        %v740 = vunpack.c.h.b16 %v301
        %v741 = vunpack.c.l.b16 %v302
        %v742 = vunpack.c.h.b16 %v302
        %v743 = vunpack.c.l.b16 %v303
        %v744 = vunpack.c.h.b16 %v303
        %v745 = vunpack.c.l.b16 %v304
        %v746 = vunpack.c.h.b16 %v304
        %v747 = vunpack.c.l.b16 %v305
        %v748 = vunpack.c.h.b16 %v305
        %v749 = vunpack.c.l.b16 %v306
        %v750 = vunpack.c.h.b16 %v306
        %v751 = vunpack.c.l.b16 %v307
        %v752 = vunpack.c.h.b16 %v307
        %v753 = vunpack.c.l.b16 %v308
        %v754 = vunpack.c.h.b16 %v308
        %v755 = vunpack.c.l.b16 %v309
        %v756 = vunpack.c.l.b16 %v310
        %v757 = vunpack.c.h.b16 %v310
        %v758 = vunpack.c.l.b16 %v311
        %v759 = vunpack.c.h.b16 %v311
        %v760 = vunpack.c.l.b16 %v312
        %v761 = vunpack.c.h.b16 %v312
        %v762 = vunpack.c.l.b16 %v313
        %v763 = vunpack.c.h.b16 %v313
        %v764 = vunpack.c.l.b16 %v314
        %v765 = vunpack.c.h.b16 %v314
        %v766 = vunpack.c.l.b16 %v315
        %v767 = vunpack.c.h.b16 %v315
        %v768 = vunpack.c.l.b16 %v316
        %v769 = vunpack.c.h.b16 %v316
        %v770 = vunpack.c.l.b16 %v317
        %v771 = vunpack.c.h.b16 %v317
        %v772 = vunpack.c.l.b16 %v318
        %v773 = vunpack.c.h.b16 %v318
        %v774 = vunpack.c.l.b16 %v319
        %v775 = vunpack.c.l.b16 %v320
        %v776 = vunpack.c.h.b16 %v320
        %v777 = vunpack.c.l.b16 %v321
        %v778 = vunpack.c.h.b16 %v321
        %v779 = vunpack.c.l.b16 %v322
        %v780 = vunpack.c.h.b16 %v322
        %v781 = vunpack.c.l.b16 %v323
        %v782 = vunpack.c.h.b16 %v323
        %v783 = vunpack.c.l.b16 %v324
        %v784 = vunpack.c.h.b16 %v324
        %v785 = vunpack.c.l.b16 %v325
        %v786 = vunpack.c.h.b16 %v325
        %v787 = vunpack.c.l.b16 %v326
        %v788 = vunpack.c.h.b16 %v326
        %v789 = vunpack.c.l.b16 %v327
        %v790 = vunpack.c.h.b16 %v327
        %v791 = vunpack.c.l.b16 %v328
        %v792 = vunpack.c.h.b16 %v328
        %v793 = vunpack.c.l.b16 %v329
        %v794 = vunpack.c.l.b16 %v330
        %v795 = vunpack.c.h.b16 %v330
        %v796 = vunpack.c.l.b16 %v331
        %v797 = vunpack.c.h.b16 %v331
        %v798 = vunpack.c.l.b16 %v332
        %v799 = vunpack.c.h.b16 %v332
        %v800 = vunpack.c.l.b16 %v333
        %v801 = vunpack.c.h.b16 %v333
        %v802 = vunpack.c.l.b16 %v334
        %v803 = vunpack.c.h.b16 %v334
        %v804 = vunpack.c.l.b16 %v335
        %v805 = vunpack.c.h.b16 %v335
        %v806 = vunpack.c.l.b16 %v336
        %v807 = vunpack.c.h.b16 %v336
        %v808 = vunpack.c.l.b16 %v337
        %v809 = vunpack.c.h.b16 %v337
        %v810 = vunpack.c.l.b16 %v338
        %v811 = vunpack.c.h.b16 %v338
        %v812 = vunpack.c.l.b16 %v339
        %v813 = vunpack.c.l.b16 %v340
        %v814 = vunpack.c.h.b16 %v340
        %v815 = vunpack.c.l.b16 %v341
        %v816 = vunpack.c.h.b16 %v341
        %v817 = vunpack.c.l.b16 %v342
        %v818 = vunpack.c.h.b16 %v342
        %v819 = vunpack.c.l.b16 %v343
        %v820 = vunpack.c.h.b16 %v343
        %v821 = vunpack.c.l.b16 %v344
        %v822 = vunpack.c.h.b16 %v344
        %v823 = vunpack.c.l.b16 %v345
        %v824 = vunpack.c.h.b16 %v345
        %v825 = vunpack.c.l.b16 %v346
        %v826 = vunpack.c.h.b16 %v346
        %v827 = vunpack.c.l.b16 %v347
        %v828 = vunpack.c.h.b16 %v347
        %v829 = vunpack.c.l.b16 %v348
        %v830 = vunpack.c.h.b16 %v348
        %v831 = vunpack.c.l.b16 %v349
        %v832 = vpack.c.b16 %v547, %v528
        %v833 = vpack.c.b16 %v548, %v529
        %v834 = vpack.c.b16 %v549, %v530
        %v835 = vpack.c.b16 %v550, %v531
        %v836 = vpack.c.b16 %v551, %v532
        %v837 = vpack.c.b16 %v552, %v533
        %v838 = vpack.c.b16 %v553, %v534
        %v839 = vpack.c.b16 %v554, %v535
        %v840 = vpack.c.b16 %v555, %v536
        %v841 = vpack.c.b16 %v556, %v537
        %v842 = vpack.c.b16 %v557, %v538
        %v843 = vpack.c.b16 %v558, %v539
        %v844 = vpack.c.b16 %v559, %v540
        %v845 = vpack.c.b16 %v560, %v541
        %v846 = vpack.c.b16 %v561, %v542
        %v847 = vpack.c.b16 %v562, %v543
        %v848 = vpack.c.b16 %v563, %v544
        %v849 = vpack.c.b16 %v564, %v545
        %v850 = vpack.c.b16 %v565, %v546
        %v851 = vpack.c.b16 %v585, %v566
        %v852 = vpack.c.b16 %v586, %v567
        %v853 = vpack.c.b16 %v587, %v568
        %v854 = vpack.c.b16 %v588, %v569
        %v855 = vpack.c.b16 %v589, %v570
        %v856 = vpack.c.b16 %v590, %v571
        %v857 = vpack.c.b16 %v591, %v572
        %v858 = vpack.c.b16 %v592, %v573
        %v859 = vpack.c.b16 %v593, %v574
        %v860 = vpack.c.b16 %v594, %v575
        %v861 = vpack.c.b16 %v595, %v576
        %v862 = vpack.c.b16 %v596, %v577
        %v863 = vpack.c.b16 %v597, %v578
        %v864 = vpack.c.b16 %v598, %v579
        %v865 = vpack.c.b16 %v599, %v580
        %v866 = vpack.c.b16 %v600, %v581
        %v867 = vpack.c.b16 %v601, %v582
        %v868 = vpack.c.b16 %v602, %v583
        %v869 = vpack.c.b16 %v603, %v584
        %v870 = vpack.c.b16 %v623, %v604
        %v871 = vpack.c.b16 %v624, %v605
        %v872 = vpack.c.b16 %v625, %v606
        %v873 = vpack.c.b16 %v626, %v607
        %v874 = vpack.c.b16 %v627, %v608
        %v875 = vpack.c.b16 %v628, %v609
        %v876 = vpack.c.b16 %v629, %v610
        %v877 = vpack.c.b16 %v630, %v611
        %v878 = vpack.c.b16 %v631, %v612
        %v879 = vpack.c.b16 %v632, %v613
        %v880 = vpack.c.b16 %v633, %v614
        %v881 = vpack.c.b16 %v634, %v615
        %v882 = vpack.c.b16 %v635, %v616
        %v883 = vpack.c.b16 %v636, %v617
        %v884 = vpack.c.b16 %v637, %v618
        %v885 = vpack.c.b16 %v638, %v619
        %v886 = vpack.c.b16 %v639, %v620
        %v887 = vpack.c.b16 %v640, %v621
        %v888 = vpack.c.b16 %v641, %v622
        %v889 = vpack.c.b16 %v661, %v642
        %v890 = vpack.c.b16 %v662, %v643
        %v891 = vpack.c.b16 %v663, %v644
        %v892 = vpack.c.b16 %v664, %v645
        %v893 = vpack.c.b16 %v665, %v646
        %v894 = vpack.c.b16 %v666, %v647
        %v895 = vpack.c.b16 %v667, %v648
        %v896 = vpack.c.b16 %v668, %v649
        %v897 = vpack.c.b16 %v669, %v650
        %v898 = vpack.c.b16 %v670, %v651
        %v899 = vpack.c.b16 %v671, %v652
        %v900 = vpack.c.b16 %v672, %v653
        %v901 = vpack.c.b16 %v673, %v654
        %v902 = vpack.c.b16 %v674, %v655
        %v903 = vpack.c.b16 %v675, %v656
        %v904 = vpack.c.b16 %v676, %v657
        %v905 = vpack.c.b16 %v677, %v658
        %v906 = vpack.c.b16 %v678, %v659
        %v907 = vpack.c.b16 %v679, %v660
        %v908 = vpack.c.b16 %v699, %v680
        %v909 = vpack.c.b16 %v700, %v681
        %v910 = vpack.c.b16 %v701, %v682
        %v911 = vpack.c.b16 %v702, %v683
        %v912 = vpack.c.b16 %v703, %v684
        %v913 = vpack.c.b16 %v704, %v685
        %v914 = vpack.c.b16 %v705, %v686
        %v915 = vpack.c.b16 %v706, %v687
        %v916 = vpack.c.b16 %v707, %v688
        %v917 = vpack.c.b16 %v708, %v689
        %v918 = vpack.c.b16 %v709, %v690
        %v919 = vpack.c.b16 %v710, %v691
        %v920 = vpack.c.b16 %v711, %v692
        %v921 = vpack.c.b16 %v712, %v693
        %v922 = vpack.c.b16 %v713, %v694
        %v923 = vpack.c.b16 %v714, %v695
        %v924 = vpack.c.b16 %v715, %v696
        %v925 = vpack.c.b16 %v716, %v697
        %v926 = vpack.c.b16 %v717, %v698
        %v927 = vpack.c.b16 %v737, %v718
        %v928 = vpack.c.b16 %v738, %v719
        %v929 = vpack.c.b16 %v739, %v720
        %v930 = vpack.c.b16 %v740, %v721
        %v931 = vpack.c.b16 %v741, %v722
        %v932 = vpack.c.b16 %v742, %v723
        %v933 = vpack.c.b16 %v743, %v724
        %v934 = vpack.c.b16 %v744, %v725
        %v935 = vpack.c.b16 %v745, %v726
        %v936 = vpack.c.b16 %v746, %v727
        %v937 = vpack.c.b16 %v747, %v728
        %v938 = vpack.c.b16 %v748, %v729
        %v939 = vpack.c.b16 %v749, %v730
        %v940 = vpack.c.b16 %v750, %v731
        %v941 = vpack.c.b16 %v751, %v732
        %v942 = vpack.c.b16 %v752, %v733
        %v943 = vpack.c.b16 %v753, %v734
        %v944 = vpack.c.b16 %v754, %v735
        %v945 = vpack.c.b16 %v755, %v736
        %v946 = vpack.c.b16 %v775, %v756
        %v947 = vpack.c.b16 %v776, %v757
        %v948 = vpack.c.b16 %v777, %v758
        %v949 = vpack.c.b16 %v778, %v759
        %v950 = vpack.c.b16 %v779, %v760
        %v951 = vpack.c.b16 %v780, %v761
        %v952 = vpack.c.b16 %v781, %v762
        %v953 = vpack.c.b16 %v782, %v763
        %v954 = vpack.c.b16 %v783, %v764
        %v955 = vpack.c.b16 %v784, %v765
        %v956 = vpack.c.b16 %v785, %v766
        %v957 = vpack.c.b16 %v786, %v767
        %v958 = vpack.c.b16 %v787, %v768
        %v959 = vpack.c.b16 %v788, %v769
        %v960 = vpack.c.b16 %v789, %v770
        %v961 = vpack.c.b16 %v790, %v771
        %v962 = vpack.c.b16 %v791, %v772
        %v963 = vpack.c.b16 %v792, %v773
        %v964 = vpack.c.b16 %v793, %v774
        %v965 = vpack.c.b16 %v813, %v794
        %v966 = vpack.c.b16 %v814, %v795
        %v967 = vpack.c.b16 %v815, %v796
        %v968 = vpack.c.b16 %v816, %v797
        %v969 = vpack.c.b16 %v817, %v798
        %v970 = vpack.c.b16 %v818, %v799
        %v971 = vpack.c.b16 %v819, %v800
        %v972 = vpack.c.b16 %v820, %v801
        %v973 = vpack.c.b16 %v821, %v802
        %v974 = vpack.c.b16 %v822, %v803
        %v975 = vpack.c.b16 %v823, %v804
        %v976 = vpack.c.b16 %v824, %v805
        %v977 = vpack.c.b16 %v825, %v806
        %v978 = vpack.c.b16 %v826, %v807
        %v979 = vpack.c.b16 %v827, %v808
        %v980 = vpack.c.b16 %v828, %v809
        %v981 = vpack.c.b16 %v829, %v810
        %v982 = vpack.c.b16 %v830, %v811
        %v983 = vpack.c.b16 %v831, %v812
        %1136 = vmatpush.bf16.msra.mxu0 %v965
        %1137 = vmatpush.bf16.msra.mxu0 %v946
        %1138 = vmatpush.bf16.msra.mxu0 %v927
        %1139 = vmatpush.bf16.msra.mxu0 %v908
        %1140 = vmatpush.bf16.msra.mxu0 %v889
        %1141 = vmatpush.bf16.msra.mxu0 %v870
        %1142 = vmatpush.bf16.msra.mxu0 %v851
        %1143 = vmatpush.bf16.msra.mxu0 %v832
        %1144 = vmatmul.bf16.gmra.mxu0 %v362
        %v1145 = vpop.f32.mrf.mxu0
        %v1146 = vadd.f32 0.0, %v1145
        %v1147 = vpop.f32.mrf.mxu0
        %v1148 = vadd.f32 0.0, %v1147
        %1149 = vmatmul.bf16.gmra.mxu0 %v363
        %v1150 = vpop.f32.mrf.mxu0
        %v1151 = vadd.f32 0.0, %v1150
        %v1152 = vpop.f32.mrf.mxu0
        %1153 = vmatmul.bf16.gmra.mxu0 %v364
        %v1154 = vpop.f32.mrf.mxu0
        %v1155 = vpop.f32.mrf.mxu0
        %1156 = vdwg.mxu0
        %1157 = vmatpush.bf16.msra.mxu0 %v966
        %1158 = vmatpush.bf16.msra.mxu0 %v947
        %1159 = vmatpush.bf16.msra.mxu0 %v928
        %1160 = vmatpush.bf16.msra.mxu0 %v909
        %1161 = vmatpush.bf16.msra.mxu0 %v890
        %1162 = vmatpush.bf16.msra.mxu0 %v871
        %1163 = vmatpush.bf16.msra.mxu0 %v852
        %1164 = vmatpush.bf16.msra.mxu0 %v833
        %1165 = vmatmul.bf16.gmra.mxu0 %v362
        %v1166 = vpop.f32.mrf.mxu0
        %v1167 = vadd.f32 0.0, %v1166
        %v1168 = vpop.f32.mrf.mxu0
        %v1169 = vadd.f32 0.0, %v1168
        %1170 = vmatmul.bf16.gmra.mxu0 %v363
        %v1171 = vpop.f32.mrf.mxu0
        %v1172 = vadd.f32 0.0, %v1171
        %v1173 = vpop.f32.mrf.mxu0
        %v1174 = vadd.f32 0.0, %v1173
        %1175 = vmatmul.bf16.gmra.mxu0 %v364
        %v1176 = vpop.f32.mrf.mxu0
        %v1177 = vpop.f32.mrf.mxu0
        %1178 = vdwg.mxu0
        %1179 = vmatpush.bf16.msra.mxu0 %v967
        %1180 = vmatpush.bf16.msra.mxu0 %v948
        %1181 = vmatpush.bf16.msra.mxu0 %v929
        %1182 = vmatpush.bf16.msra.mxu0 %v910
        %1183 = vmatpush.bf16.msra.mxu0 %v891
        %1184 = vmatpush.bf16.msra.mxu0 %v872
        %1185 = vmatpush.bf16.msra.mxu0 %v853
        %1186 = vmatpush.bf16.msra.mxu0 %v834
        %1187 = vmatmul.bf16.gmra.mxu0 %v362
        %v1188 = vpop.f32.mrf.mxu0
        %v1189 = vadd.f32 0.0, %v1188
        %v1190 = vpop.f32.mrf.mxu0
        %v1191 = vadd.f32 0.0, %v1190
        %1192 = vmatmul.bf16.gmra.mxu0 %v363
        %v1193 = vpop.f32.mrf.mxu0
        %v1194 = vadd.f32 0.0, %v1193
        %v1195 = vpop.f32.mrf.mxu0
        %v1196 = vadd.f32 0.0, %v1195
        %1197 = vmatmul.bf16.gmra.mxu0 %v364
        %v1198 = vpop.f32.mrf.mxu0
        %v1199 = vpop.f32.mrf.mxu0
        %1200 = vdwg.mxu0
        %1201 = vmatpush.bf16.msra.mxu0 %v968
        %1202 = vmatpush.bf16.msra.mxu0 %v949
        %1203 = vmatpush.bf16.msra.mxu0 %v930
        %1204 = vmatpush.bf16.msra.mxu0 %v911
        %1205 = vmatpush.bf16.msra.mxu0 %v892
        %1206 = vmatpush.bf16.msra.mxu0 %v873
        %1207 = vmatpush.bf16.msra.mxu0 %v854
        %1208 = vmatpush.bf16.msra.mxu0 %v835
        %1209 = vmatmul.bf16.gmra.mxu0 %v362
        %v1210 = vpop.f32.mrf.mxu0
        %v1211 = vadd.f32 0.0, %v1210
        %v1212 = vpop.f32.mrf.mxu0
        %v1213 = vadd.f32 0.0, %v1212
        %1214 = vmatmul.bf16.gmra.mxu0 %v363
        %v1215 = vpop.f32.mrf.mxu0
        %v1216 = vadd.f32 0.0, %v1215
        %v1217 = vpop.f32.mrf.mxu0
        %v1218 = vadd.f32 0.0, %v1217
        %1219 = vmatmul.bf16.gmra.mxu0 %v364
        %v1220 = vpop.f32.mrf.mxu0
        %v1221 = vpop.f32.mrf.mxu0
        %1222 = vdwg.mxu0
        %1223 = vmatpush.bf16.msra.mxu0 %v969
        %1224 = vmatpush.bf16.msra.mxu0 %v950
        %1225 = vmatpush.bf16.msra.mxu0 %v931
        %1226 = vmatpush.bf16.msra.mxu0 %v912
        %1227 = vmatpush.bf16.msra.mxu0 %v893
        %1228 = vmatpush.bf16.msra.mxu0 %v874
        %1229 = vmatpush.bf16.msra.mxu0 %v855
        %1230 = vmatpush.bf16.msra.mxu0 %v836
        %1231 = vmatmul.bf16.gmra.mxu0 %v362
        %v1232 = vpop.f32.mrf.mxu0
        %v1233 = vadd.f32 0.0, %v1232
        %v1234 = vpop.f32.mrf.mxu0
        %v1235 = vadd.f32 0.0, %v1234
        %1236 = vmatmul.bf16.gmra.mxu0 %v363
        %v1237 = vpop.f32.mrf.mxu0
        %v1238 = vadd.f32 0.0, %v1237
        %v1239 = vpop.f32.mrf.mxu0
        %v1240 = vadd.f32 0.0, %v1239
        %1241 = vmatmul.bf16.gmra.mxu0 %v364
        %v1242 = vpop.f32.mrf.mxu0
        %v1243 = vpop.f32.mrf.mxu0
        %1244 = vdwg.mxu0
        %1245 = vmatpush.bf16.msra.mxu0 %v970
        %1246 = vmatpush.bf16.msra.mxu0 %v951
        %1247 = vmatpush.bf16.msra.mxu0 %v932
        %1248 = vmatpush.bf16.msra.mxu0 %v913
        %1249 = vmatpush.bf16.msra.mxu0 %v894
        %1250 = vmatpush.bf16.msra.mxu0 %v875
        %1251 = vmatpush.bf16.msra.mxu0 %v856
        %1252 = vmatpush.bf16.msra.mxu0 %v837
        %1253 = vmatmul.bf16.gmra.mxu0 %v362
        %v1254 = vpop.f32.mrf.mxu0
        %v1255 = vadd.f32 0.0, %v1254
        %v1256 = vpop.f32.mrf.mxu0
        %v1257 = vadd.f32 0.0, %v1256
        %1258 = vmatmul.bf16.gmra.mxu0 %v363
        %v1259 = vpop.f32.mrf.mxu0
        %v1260 = vadd.f32 0.0, %v1259
        %v1261 = vpop.f32.mrf.mxu0
        %v1262 = vadd.f32 0.0, %v1261
        %1263 = vmatmul.bf16.gmra.mxu0 %v364
        %v1264 = vpop.f32.mrf.mxu0
        %v1265 = vpop.f32.mrf.mxu0
        %1266 = vdwg.mxu0
        %1267 = vmatpush.bf16.msra.mxu0 %v971
        %1268 = vmatpush.bf16.msra.mxu0 %v952
        %1269 = vmatpush.bf16.msra.mxu0 %v933
        %1270 = vmatpush.bf16.msra.mxu0 %v914
        %1271 = vmatpush.bf16.msra.mxu0 %v895
        %1272 = vmatpush.bf16.msra.mxu0 %v876
        %1273 = vmatpush.bf16.msra.mxu0 %v857
        %1274 = vmatpush.bf16.msra.mxu0 %v838
        %1275 = vmatmul.bf16.gmra.mxu0 %v362
        %v1276 = vpop.f32.mrf.mxu0
        %v1277 = vadd.f32 0.0, %v1276
        %v1278 = vpop.f32.mrf.mxu0
        %v1279 = vadd.f32 0.0, %v1278
        %1280 = vmatmul.bf16.gmra.mxu0 %v363
        %v1281 = vpop.f32.mrf.mxu0
        %v1282 = vadd.f32 0.0, %v1281
        %v1283 = vpop.f32.mrf.mxu0
        %v1284 = vadd.f32 0.0, %v1283
        %1285 = vmatmul.bf16.gmra.mxu0 %v364
        %v1286 = vpop.f32.mrf.mxu0
        %v1287 = vpop.f32.mrf.mxu0
        %1288 = vdwg.mxu0
        %1289 = vmatpush.bf16.msra.mxu0 %v972
        %1290 = vmatpush.bf16.msra.mxu0 %v953
        %1291 = vmatpush.bf16.msra.mxu0 %v934
        %1292 = vmatpush.bf16.msra.mxu0 %v915
        %1293 = vmatpush.bf16.msra.mxu0 %v896
        %1294 = vmatpush.bf16.msra.mxu0 %v877
        %1295 = vmatpush.bf16.msra.mxu0 %v858
        %1296 = vmatpush.bf16.msra.mxu0 %v839
        %1297 = vmatmul.bf16.gmra.mxu0 %v362
        %v1298 = vpop.f32.mrf.mxu0
        %v1299 = vadd.f32 0.0, %v1298
        %v1300 = vpop.f32.mrf.mxu0
        %v1301 = vadd.f32 0.0, %v1300
        %1302 = vmatmul.bf16.gmra.mxu0 %v363
        %v1303 = vpop.f32.mrf.mxu0
        %v1304 = vadd.f32 0.0, %v1303
        %v1305 = vpop.f32.mrf.mxu0
        %v1306 = vadd.f32 0.0, %v1305
        %1307 = vmatmul.bf16.gmra.mxu0 %v364
        %v1308 = vpop.f32.mrf.mxu0
        %v1309 = vpop.f32.mrf.mxu0
        %1310 = vdwg.mxu0
        %1311 = vmatpush.bf16.msra.mxu0 %v973
        %1312 = vmatpush.bf16.msra.mxu0 %v954
        %1313 = vmatpush.bf16.msra.mxu0 %v935
        %1314 = vmatpush.bf16.msra.mxu0 %v916
        %1315 = vmatpush.bf16.msra.mxu0 %v897
        %1316 = vmatpush.bf16.msra.mxu0 %v878
        %1317 = vmatpush.bf16.msra.mxu0 %v859
        %1318 = vmatpush.bf16.msra.mxu0 %v840
        %1319 = vmatmul.bf16.gmra.mxu0 %v362
        %v1320 = vpop.f32.mrf.mxu0
        %v1321 = vpop.f32.mrf.mxu0
        %v1322 = vadd.f32 0.0, %v1321
        %1323 = vmatmul.bf16.gmra.mxu0 %v363
        %v1324 = vpop.f32.mrf.mxu0
        %v1325 = vadd.f32 0.0, %v1324
        %v1326 = vpop.f32.mrf.mxu0
        %v1327 = vadd.f32 0.0, %v1326
        %1328 = vmatmul.bf16.gmra.mxu0 %v364
        %v1329 = vpop.f32.mrf.mxu0
        %v1330 = vpop.f32.mrf.mxu0
        %1331 = vdwg.mxu0
        %1332 = vmatpush.bf16.msra.mxu0 %v974
        %1333 = vmatpush.bf16.msra.mxu0 %v955
        %1334 = vmatpush.bf16.msra.mxu0 %v936
        %1335 = vmatpush.bf16.msra.mxu0 %v917
        %1336 = vmatpush.bf16.msra.mxu0 %v898
        %1337 = vmatpush.bf16.msra.mxu0 %v879
        %1338 = vmatpush.bf16.msra.mxu0 %v860
        %1339 = vmatpush.bf16.msra.mxu0 %v841
        %1340 = vmatmul.bf16.gmra.mxu0 %v362
        %v1341 = vpop.f32.mrf.mxu0
        %v1342 = vpop.f32.mrf.mxu0
        %v1343 = vadd.f32 0.0, %v1342
        %1344 = vmatmul.bf16.gmra.mxu0 %v363
        %v1345 = vpop.f32.mrf.mxu0
        %v1346 = vadd.f32 0.0, %v1345
        %v1347 = vpop.f32.mrf.mxu0
        %v1348 = vadd.f32 0.0, %v1347
        %1349 = vmatmul.bf16.gmra.mxu0 %v364
        %v1350 = vpop.f32.mrf.mxu0
        %v1351 = vadd.f32 0.0, %v1350
        %v1352 = vpop.f32.mrf.mxu0
        %1353 = vdwg.mxu0
        %1354 = vmatpush.bf16.msra.mxu0 %v975
        %1355 = vmatpush.bf16.msra.mxu0 %v956
        %1356 = vmatpush.bf16.msra.mxu0 %v937
        %1357 = vmatpush.bf16.msra.mxu0 %v918
        %1358 = vmatpush.bf16.msra.mxu0 %v899
        %1359 = vmatpush.bf16.msra.mxu0 %v880
        %1360 = vmatpush.bf16.msra.mxu0 %v861
        %1361 = vmatpush.bf16.msra.mxu0 %v842
        %1362 = vmatmul.bf16.gmra.mxu0 %v362
        %v1363 = vpop.f32.mrf.mxu0
        %v1364 = vpop.f32.mrf.mxu0
        %v1365 = vadd.f32 0.0, %v1364
        %1366 = vmatmul.bf16.gmra.mxu0 %v363
        %v1367 = vpop.f32.mrf.mxu0
        %v1368 = vadd.f32 0.0, %v1367
        %v1369 = vpop.f32.mrf.mxu0
        %v1370 = vadd.f32 0.0, %v1369
        %1371 = vmatmul.bf16.gmra.mxu0 %v364
        %v1372 = vpop.f32.mrf.mxu0
        %v1373 = vadd.f32 0.0, %v1372
        %v1374 = vpop.f32.mrf.mxu0
        %1375 = vdwg.mxu0
        %1376 = vmatpush.bf16.msra.mxu0 %v976
        %1377 = vmatpush.bf16.msra.mxu0 %v957
        %1378 = vmatpush.bf16.msra.mxu0 %v938
        %1379 = vmatpush.bf16.msra.mxu0 %v919
        %1380 = vmatpush.bf16.msra.mxu0 %v900
        %1381 = vmatpush.bf16.msra.mxu0 %v881
        %1382 = vmatpush.bf16.msra.mxu0 %v862
        %1383 = vmatpush.bf16.msra.mxu0 %v843
        %1384 = vmatmul.bf16.gmra.mxu0 %v362
        %v1385 = vpop.f32.mrf.mxu0
        %v1386 = vpop.f32.mrf.mxu0
        %v1387 = vadd.f32 0.0, %v1386
        %1388 = vmatmul.bf16.gmra.mxu0 %v363
        %v1389 = vpop.f32.mrf.mxu0
        %v1390 = vadd.f32 0.0, %v1389
        %v1391 = vpop.f32.mrf.mxu0
        %v1392 = vadd.f32 0.0, %v1391
        %1393 = vmatmul.bf16.gmra.mxu0 %v364
        %v1394 = vpop.f32.mrf.mxu0
        %v1395 = vadd.f32 0.0, %v1394
        %v1396 = vpop.f32.mrf.mxu0
        %1397 = vdwg.mxu0
        %1398 = vmatpush.bf16.msra.mxu0 %v977
        %1399 = vmatpush.bf16.msra.mxu0 %v958
        %1400 = vmatpush.bf16.msra.mxu0 %v939
        %1401 = vmatpush.bf16.msra.mxu0 %v920
        %1402 = vmatpush.bf16.msra.mxu0 %v901
        %1403 = vmatpush.bf16.msra.mxu0 %v882
        %1404 = vmatpush.bf16.msra.mxu0 %v863
        %1405 = vmatpush.bf16.msra.mxu0 %v844
        %1406 = vmatmul.bf16.gmra.mxu0 %v362
        %v1407 = vpop.f32.mrf.mxu0
        %v1408 = vpop.f32.mrf.mxu0
        %v1409 = vadd.f32 0.0, %v1408
        %1410 = vmatmul.bf16.gmra.mxu0 %v363
        %v1411 = vpop.f32.mrf.mxu0
        %v1412 = vadd.f32 0.0, %v1411
        %v1413 = vpop.f32.mrf.mxu0
        %v1414 = vadd.f32 0.0, %v1413
        %1415 = vmatmul.bf16.gmra.mxu0 %v364
        %v1416 = vpop.f32.mrf.mxu0
        %v1417 = vadd.f32 0.0, %v1416
        %v1418 = vpop.f32.mrf.mxu0
        %1419 = vdwg.mxu0
        %1420 = vmatpush.bf16.msra.mxu0 %v978
        %1421 = vmatpush.bf16.msra.mxu0 %v959
        %1422 = vmatpush.bf16.msra.mxu0 %v940
        %1423 = vmatpush.bf16.msra.mxu0 %v921
        %1424 = vmatpush.bf16.msra.mxu0 %v902
        %1425 = vmatpush.bf16.msra.mxu0 %v883
        %1426 = vmatpush.bf16.msra.mxu0 %v864
        %1427 = vmatpush.bf16.msra.mxu0 %v845
        %1428 = vmatmul.bf16.gmra.mxu0 %v362
        %v1429 = vpop.f32.mrf.mxu0
        %v1430 = vpop.f32.mrf.mxu0
        %v1431 = vadd.f32 0.0, %v1430
        %1432 = vmatmul.bf16.gmra.mxu0 %v363
        %v1433 = vpop.f32.mrf.mxu0
        %v1434 = vadd.f32 0.0, %v1433
        %v1435 = vpop.f32.mrf.mxu0
        %v1436 = vadd.f32 0.0, %v1435
        %1437 = vmatmul.bf16.gmra.mxu0 %v364
        %v1438 = vpop.f32.mrf.mxu0
        %v1439 = vadd.f32 0.0, %v1438
        %v1440 = vpop.f32.mrf.mxu0
        %1441 = vdwg.mxu0
        %1442 = vmatpush.bf16.msra.mxu0 %v979
        %1443 = vmatpush.bf16.msra.mxu0 %v960
        %1444 = vmatpush.bf16.msra.mxu0 %v941
        %1445 = vmatpush.bf16.msra.mxu0 %v922
        %1446 = vmatpush.bf16.msra.mxu0 %v903
        %1447 = vmatpush.bf16.msra.mxu0 %v884
        %1448 = vmatpush.bf16.msra.mxu0 %v865
        %1449 = vmatpush.bf16.msra.mxu0 %v846
        %1450 = vmatmul.bf16.gmra.mxu0 %v362
        %v1451 = vpop.f32.mrf.mxu0
        %v1452 = vpop.f32.mrf.mxu0
        %v1453 = vadd.f32 0.0, %v1452
        %1454 = vmatmul.bf16.gmra.mxu0 %v363
        %v1455 = vpop.f32.mrf.mxu0
        %v1456 = vadd.f32 0.0, %v1455
        %v1457 = vpop.f32.mrf.mxu0
        %v1458 = vadd.f32 0.0, %v1457
        %1459 = vmatmul.bf16.gmra.mxu0 %v364
        %v1460 = vpop.f32.mrf.mxu0
        %v1461 = vadd.f32 0.0, %v1460
        %v1462 = vpop.f32.mrf.mxu0
        %1463 = vdwg.mxu0
        %1464 = vmatpush.bf16.msra.mxu0 %v980
        %1465 = vmatpush.bf16.msra.mxu0 %v961
        %1466 = vmatpush.bf16.msra.mxu0 %v942
        %1467 = vmatpush.bf16.msra.mxu0 %v923
        %1468 = vmatpush.bf16.msra.mxu0 %v904
        %1469 = vmatpush.bf16.msra.mxu0 %v885
        %1470 = vmatpush.bf16.msra.mxu0 %v866
        %1471 = vmatpush.bf16.msra.mxu0 %v847
        %1472 = vmatmul.bf16.gmra.mxu0 %v362
        %v1473 = vpop.f32.mrf.mxu0
        %v1474 = vpop.f32.mrf.mxu0
        %v1475 = vadd.f32 0.0, %v1474
        %1476 = vmatmul.bf16.gmra.mxu0 %v363
        %v1477 = vpop.f32.mrf.mxu0
        %v1478 = vadd.f32 0.0, %v1477
        %v1479 = vpop.f32.mrf.mxu0
        %v1480 = vadd.f32 0.0, %v1479
        %1481 = vmatmul.bf16.gmra.mxu0 %v364
        %v1482 = vpop.f32.mrf.mxu0
        %v1483 = vadd.f32 0.0, %v1482
        %v1484 = vpop.f32.mrf.mxu0
        %1485 = vdwg.mxu0
        %1486 = vmatpush.bf16.msra.mxu0 %v981
        %1487 = vmatpush.bf16.msra.mxu0 %v962
        %1488 = vmatpush.bf16.msra.mxu0 %v943
        %1489 = vmatpush.bf16.msra.mxu0 %v924
        %1490 = vmatpush.bf16.msra.mxu0 %v905
        %1491 = vmatpush.bf16.msra.mxu0 %v886
        %1492 = vmatpush.bf16.msra.mxu0 %v867
        %1493 = vmatpush.bf16.msra.mxu0 %v848
        %1494 = vmatmul.bf16.gmra.mxu0 %v362
        %v1495 = vpop.f32.mrf.mxu0
        %v1496 = vpop.f32.mrf.mxu0
        %1497 = vmatmul.bf16.gmra.mxu0 %v363
        %v1498 = vpop.f32.mrf.mxu0
        %v1499 = vadd.f32 0.0, %v1498
        %v1500 = vpop.f32.mrf.mxu0
        %v1501 = vadd.f32 0.0, %v1500
        %1502 = vmatmul.bf16.gmra.mxu0 %v364
        %v1503 = vpop.f32.mrf.mxu0
        %v1504 = vadd.f32 0.0, %v1503
        %v1505 = vpop.f32.mrf.mxu0
        %1506 = vdwg.mxu0
        %1507 = vmatpush.bf16.msra.mxu0 %v982
        %1508 = vmatpush.bf16.msra.mxu0 %v963
        %1509 = vmatpush.bf16.msra.mxu0 %v944
        %1510 = vmatpush.bf16.msra.mxu0 %v925
        %1511 = vmatpush.bf16.msra.mxu0 %v906
        %1512 = vmatpush.bf16.msra.mxu0 %v887
        %1513 = vmatpush.bf16.msra.mxu0 %v868
        %1514 = vmatpush.bf16.msra.mxu0 %v849
        %1515 = vmatmul.bf16.gmra.mxu0 %v362
        %v1516 = vpop.f32.mrf.mxu0
        %v1517 = vpop.f32.mrf.mxu0
        %1518 = vmatmul.bf16.gmra.mxu0 %v363
        %v1519 = vpop.f32.mrf.mxu0
        %v1520 = vadd.f32 0.0, %v1519
        %v1521 = vpop.f32.mrf.mxu0
        %v1522 = vadd.f32 0.0, %v1521
        %1523 = vmatmul.bf16.gmra.mxu0 %v364
        %v1524 = vpop.f32.mrf.mxu0
        %v1525 = vadd.f32 0.0, %v1524
        %v1526 = vpop.f32.mrf.mxu0
        %v1527 = vadd.f32 0.0, %v1526
        %1528 = vdwg.mxu0
        %1529 = vmatpush.bf16.msra.mxu0 %v983
        %1530 = vmatpush.bf16.msra.mxu0 %v964
        %1531 = vmatpush.bf16.msra.mxu0 %v945
        %1532 = vmatpush.bf16.msra.mxu0 %v926
        %1533 = vmatpush.bf16.msra.mxu0 %v907
        %1534 = vmatpush.bf16.msra.mxu0 %v888
        %1535 = vmatpush.bf16.msra.mxu0 %v869
        %1536 = vmatpush.bf16.msra.mxu0 %v850
        %1537 = vmatmul.bf16.gmra.mxu0 %v362
        %v1538 = vpop.f32.mrf.mxu0
        %v1539 = vpop.f32.mrf.mxu0
        %1540 = vmatmul.bf16.gmra.mxu0 %v363
        %v1541 = vpop.f32.mrf.mxu0
        %v1542 = vadd.f32 0.0, %v1541
        %v1543 = vpop.f32.mrf.mxu0
        %v1544 = vadd.f32 0.0, %v1543
        %1545 = vmatmul.bf16.gmra.mxu0 %v364
        %v1546 = vpop.f32.mrf.mxu0
        %v1547 = vadd.f32 0.0, %v1546
        %v1548 = vpop.f32.mrf.mxu0
        %v1549 = vadd.f32 0.0, %v1548
        %1550 = vdwg.mxu0
        %v1551 = vld [vmem:[%s2] sm:$0xff]
        %v1552 = vld [vmem:[%s2 + $0x8] sm:$0xff]
        %v1553 = vld [vmem:[%s2 + $0x10] sm:$0xff]
        %v1554 = vadd.f32 %v1551, %v1146
        %v1555 = vadd.f32 %v1552, %v1148
        %v1556 = vadd.f32 %v1553, %v1151
        %vm1561 = vcmask 1046528
        %v1562 = vrot.slane %v1167, 1
        %v1563 = vrot.slane %v1169, 1
        %v1564 = vsel %vm1561, %v1562, %v1563
        %v1565 = vrot.slane %v1172, 1
        %v1566 = vsel %vm1561, %v1563, %v1565
        %v1567 = vrot.slane %v1174, 1
        %v1568 = vsel %vm1561, %v1565, %v1567
        %v1572 = vadd.f32 %v1554, %v1564
        %v1573 = vadd.f32 %v1555, %v1566
        %v1574 = vadd.f32 %v1556, %v1568
        %vm1579 = vcmask 1045504
        %v1580 = vrot.slane %v1189, 2
        %v1581 = vrot.slane %v1191, 2
        %v1582 = vsel %vm1579, %v1580, %v1581
        %v1583 = vrot.slane %v1194, 2
        %v1584 = vsel %vm1579, %v1581, %v1583
        %v1585 = vrot.slane %v1196, 2
        %v1586 = vsel %vm1579, %v1583, %v1585
        %v1590 = vadd.f32 %v1572, %v1582
        %v1591 = vadd.f32 %v1573, %v1584
        %v1592 = vadd.f32 %v1574, %v1586
        %vm1597 = vcmask 1044480
        %v1598 = vrot.slane %v1211, 3
        %v1599 = vrot.slane %v1213, 3
        %v1600 = vsel %vm1597, %v1598, %v1599
        %v1601 = vrot.slane %v1216, 3
        %v1602 = vsel %vm1597, %v1599, %v1601
        %v1603 = vrot.slane %v1218, 3
        %v1604 = vsel %vm1597, %v1601, %v1603
        %v1608 = vadd.f32 %v1590, %v1600
        %v1609 = vadd.f32 %v1591, %v1602
        %v1610 = vadd.f32 %v1592, %v1604
        %vm1615 = vcmask 1043456
        %v1616 = vrot.slane %v1233, 4
        %v1617 = vrot.slane %v1235, 4
        %v1618 = vsel %vm1615, %v1616, %v1617
        %v1619 = vrot.slane %v1238, 4
        %v1620 = vsel %vm1615, %v1617, %v1619
        %v1621 = vrot.slane %v1240, 4
        %v1622 = vsel %vm1615, %v1619, %v1621
        %v1626 = vadd.f32 %v1608, %v1618
        %v1627 = vadd.f32 %v1609, %v1620
        %v1628 = vadd.f32 %v1610, %v1622
        %vm1633 = vcmask 1042432
        %v1634 = vrot.slane %v1255, 5
        %v1635 = vrot.slane %v1257, 5
        %v1636 = vsel %vm1633, %v1634, %v1635
        %v1637 = vrot.slane %v1260, 5
        %v1638 = vsel %vm1633, %v1635, %v1637
        %v1639 = vrot.slane %v1262, 5
        %v1640 = vsel %vm1633, %v1637, %v1639
        %v1644 = vadd.f32 %v1626, %v1636
        %v1645 = vadd.f32 %v1627, %v1638
        %v1646 = vadd.f32 %v1628, %v1640
        %vm1651 = vcmask 1041408
        %v1652 = vrot.slane %v1277, 6
        %v1653 = vrot.slane %v1279, 6
        %v1654 = vsel %vm1651, %v1652, %v1653
        %v1655 = vrot.slane %v1282, 6
        %v1656 = vsel %vm1651, %v1653, %v1655
        %v1657 = vrot.slane %v1284, 6
        %v1658 = vsel %vm1651, %v1655, %v1657
        %v1662 = vadd.f32 %v1644, %v1654
        %v1663 = vadd.f32 %v1645, %v1656
        %v1664 = vadd.f32 %v1646, %v1658
        %vm1669 = vcmask 1040384
        %v1670 = vrot.slane %v1299, 7
        %v1671 = vrot.slane %v1301, 7
        %v1672 = vsel %vm1669, %v1670, %v1671
        %v1673 = vrot.slane %v1304, 7
        %v1674 = vsel %vm1669, %v1671, %v1673
        %v1675 = vrot.slane %v1306, 7
        %v1676 = vsel %vm1669, %v1673, %v1675
        %v1680 = vadd.f32 %v1662, %v1672
        %v1681 = vadd.f32 %v1663, %v1674
        %v1682 = vadd.f32 %v1664, %v1676
        %v1683 = vadd.f32 %v1680, %v1322
        %v1684 = vadd.f32 %v1681, %v1325
        %v1685 = vadd.f32 %v1682, %v1327
        %v1690 = vrot.slane %v1343, 1
        %v1691 = vrot.slane %v1346, 1
        %v1692 = vsel %vm1561, %v1690, %v1691
        %v1693 = vrot.slane %v1348, 1
        %v1694 = vsel %vm1561, %v1691, %v1693
        %v1695 = vrot.slane %v1351, 1
        %v1696 = vsel %vm1561, %v1693, %v1695
        %v1700 = vadd.f32 %v1683, %v1692
        %v1701 = vadd.f32 %v1684, %v1694
        %v1702 = vadd.f32 %v1685, %v1696
        %v1707 = vrot.slane %v1365, 2
        %v1708 = vrot.slane %v1368, 2
        %v1709 = vsel %vm1579, %v1707, %v1708
        %v1710 = vrot.slane %v1370, 2
        %v1711 = vsel %vm1579, %v1708, %v1710
        %v1712 = vrot.slane %v1373, 2
        %v1713 = vsel %vm1579, %v1710, %v1712
        %v1717 = vadd.f32 %v1700, %v1709
        %v1718 = vadd.f32 %v1701, %v1711
        %v1719 = vadd.f32 %v1702, %v1713
        %v1724 = vrot.slane %v1387, 3
        %v1725 = vrot.slane %v1390, 3
        %v1726 = vsel %vm1597, %v1724, %v1725
        %v1727 = vrot.slane %v1392, 3
        %v1728 = vsel %vm1597, %v1725, %v1727
        %v1729 = vrot.slane %v1395, 3
        %v1730 = vsel %vm1597, %v1727, %v1729
        %v1734 = vadd.f32 %v1717, %v1726
        %v1735 = vadd.f32 %v1718, %v1728
        %v1736 = vadd.f32 %v1719, %v1730
        %v1741 = vrot.slane %v1409, 4
        %v1742 = vrot.slane %v1412, 4
        %v1743 = vsel %vm1615, %v1741, %v1742
        %v1744 = vrot.slane %v1414, 4
        %v1745 = vsel %vm1615, %v1742, %v1744
        %v1746 = vrot.slane %v1417, 4
        %v1747 = vsel %vm1615, %v1744, %v1746
        %v1751 = vadd.f32 %v1734, %v1743
        %v1752 = vadd.f32 %v1735, %v1745
        %v1753 = vadd.f32 %v1736, %v1747
        %v1758 = vrot.slane %v1431, 5
        %v1759 = vrot.slane %v1434, 5
        %v1760 = vsel %vm1633, %v1758, %v1759
        %v1761 = vrot.slane %v1436, 5
        %v1762 = vsel %vm1633, %v1759, %v1761
        %v1763 = vrot.slane %v1439, 5
        %v1764 = vsel %vm1633, %v1761, %v1763
        %v1768 = vadd.f32 %v1751, %v1760
        %v1769 = vadd.f32 %v1752, %v1762
        %v1770 = vadd.f32 %v1753, %v1764
        %v1775 = vrot.slane %v1453, 6
        %v1776 = vrot.slane %v1456, 6
        %v1777 = vsel %vm1651, %v1775, %v1776
        %v1778 = vrot.slane %v1458, 6
        %v1779 = vsel %vm1651, %v1776, %v1778
        %v1780 = vrot.slane %v1461, 6
        %v1781 = vsel %vm1651, %v1778, %v1780
        %v1785 = vadd.f32 %v1768, %v1777
        %v1786 = vadd.f32 %v1769, %v1779
        %v1787 = vadd.f32 %v1770, %v1781
        %v1792 = vrot.slane %v1475, 7
        %v1793 = vrot.slane %v1478, 7
        %v1794 = vsel %vm1669, %v1792, %v1793
        %v1795 = vrot.slane %v1480, 7
        %v1796 = vsel %vm1669, %v1793, %v1795
        %v1797 = vrot.slane %v1483, 7
        %v1798 = vsel %vm1669, %v1795, %v1797
        %v1802 = vadd.f32 %v1785, %v1794
        %v1803 = vadd.f32 %v1786, %v1796
        %v1804 = vadd.f32 %v1787, %v1798
        %v1805 = vadd.f32 %v1802, %v1499
        %v1806 = vadd.f32 %v1803, %v1501
        %v1807 = vadd.f32 %v1804, %v1504
        %v1812 = vrot.slane %v1520, 1
        %v1813 = vrot.slane %v1522, 1
        %v1814 = vsel %vm1561, %v1812, %v1813
        %v1815 = vrot.slane %v1525, 1
        %v1816 = vsel %vm1561, %v1813, %v1815
        %v1817 = vrot.slane %v1527, 1
        %v1818 = vsel %vm1561, %v1815, %v1817
        %v1822 = vadd.f32 %v1805, %v1814
        %v1823 = vadd.f32 %v1806, %v1816
        %v1824 = vadd.f32 %v1807, %v1818
        %v1829 = vrot.slane %v1542, 2
        %v1830 = vrot.slane %v1544, 2
        %v1831 = vsel %vm1579, %v1829, %v1830
        %v1832 = vrot.slane %v1547, 2
        %v1833 = vsel %vm1579, %v1830, %v1832
        %v1834 = vrot.slane %v1549, 2
        %v1835 = vsel %vm1579, %v1832, %v1834
        %v1839 = vadd.f32 %v1822, %v1831
        %v1840 = vadd.f32 %v1823, %v1833
        %v1841 = vadd.f32 %v1824, %v1835
        %v1842 = vmax.f32 %v1839, %v1840
        %v1843 = vmax.f32 %v1842, %v1841
        %v1844 = vrot.slane %v1843, 4
        %v1845 = vmax.f32 %v1843, %v1844
        %v1846 = vrot.slane %v1845, 2
        %v1847 = vmax.f32 %v1845, %v1846
        %v1848 = vrot.slane %v1847, 1
        %v1849 = vmax.f32 %v1847, %v1848
        %1850 = vst [vmem:[%s183] sm:$0x1] %v1849
        %p1851 = scmp.lt.s32.totalorder %s15, 1
        %s1852 = scalar_select %p1851, %s15, 1
        %s1853 = scalar_lea.vmem %s3, %s1852
        // Predicated region
        $region37: #{cnn_forward.1} parent=31 // pred_check
          %p1854 = pneg %p101
        $region38: #{cnn_forward.1} parent=31 // pred_check_branch
          %1856 = sbr.rel (%p1854) target = $region40
        $region39: #{cnn_forward.1} parent=31 // pred_region
          _
        $region40: #{cnn_forward.1} parent=31 // pred_fallthru
          _
      $region32: #{cnn_forward.1} parent=5 // pred_fallthru
        _
      %p1857 = scmp.le.s32.totalorder 2, %s10
      // Predicated region
      $region41: #{cnn_forward.1} parent=5 // pred_check
        %p1858 = pneg %p1857
      $region42: #{cnn_forward.1} parent=5 // pred_check_branch
        %1860 = sbr.rel (%p1858) target = $region44
      $region43: #{cnn_forward.1} parent=5 // pred_region
        %s1861 = ssub.s32 %s10, 2
        // Predicated region
        $region45: #{cnn_forward.1} parent=43 // pred_check
          %p1862 = pneg %p107
        $region46: #{cnn_forward.1} parent=43 // pred_check_branch
          %1864 = sbr.rel (%p1862) target = $region48
        $region47: #{cnn_forward.1} parent=43 // pred_region
          %p1865 = scmp.lt.s32.totalorder %s16, 1
          %s1866 = scalar_select %p1865, %s16, 1
          %s1867 = scalar_lea.vmem %s3, %s1866
        $region48: #{cnn_forward.1} parent=43 // pred_fallthru
          _
      $region44: #{cnn_forward.1} parent=5 // pred_fallthru
        _
    $region6: #{cnn_forward.1} parent=1 // loop_footer
      %s14 = sadd.s32 1, %s10
    $region7: #{cnn_forward.1} parent=1 // loop_footer_branch
      %9 = sbr.rel target = $region3
    $region8: #{cnn_forward.1} parent=1 // loop_exit
      _
    %1868 = vsyncpa [#allocation3], 1
    %s1869 = scalar_lea.sflag [#allocation3], 1
    %1870 = vsyncpa %s1869, 1

</llo_original>
